<compile_context>
chip_gen: v5e
topology: v5e:2x2
jax: 0.10.0
libtpu: 0.0.40
codegen_flags: <defaults>
</compile_context>

<pallas_src>
import functools
import math

import jax
import jax.numpy as jnp
from jax.experimental import pallas as pl
from jax.experimental.pallas import tpu as pltpu


def _round_up(x, m):
    return ((x + m - 1) // m) * m


def _note_encoder_kernel(tok_ref, typ_ref, dur_ref, table_ref, w_ref, b_ref,
                         out_ref, *, n_vocab):
    # tok_ref/typ_ref: (tile_n, 1) int32 ; dur_ref: (tile_n, 1) f32
    # table_ref: (K, H) bf16  -- rows [0, n_vocab) = emb * sqrt(H),
    #            rows [n_vocab, n_vocab+5) = type_emb * sqrt(H), rest zero.
    # w_ref/b_ref: (1, H) f32 ; out_ref: (tile_n, H) f32
    tile_n = out_ref.shape[0]
    K = table_ref.shape[0]

    tok = tok_ref[...]                        # (tile_n, 1) i32
    typ = typ_ref[...] + jnp.int32(n_vocab)   # shifted into the stacked table
    col = jax.lax.broadcasted_iota(jnp.int32, (tile_n, K), 1)

    # Combined one-hot for token + type lookup (token and shifted type indices
    # live in disjoint column ranges, so OR-ing the compares is exact; 0/1 is
    # exact in bf16).
    onehot = ((col == tok) | (col == typ)).astype(jnp.bfloat16)

    # Single bf16 MXU matmul, f32 accumulation:
    #   = emb_scaled[tok] + type_emb_scaled[typ]
    gathered = jnp.dot(onehot, table_ref[...],
                       preferred_element_type=jnp.float32)

    # dur_ln: Linear(1, H) on the VPU in f32: dur * w + b (broadcast over H).
    dur_term = dur_ref[...] * w_ref[...] + b_ref[...]

    out_ref[...] = (gathered + dur_term).astype(out_ref.dtype)


def prepare_note_encoder_params(params):
    """One-time parameter transform: fold sqrt(H) into the tables and stack the
    token + type embeddings into a single bf16 MXU table (padded to a multiple
    of 128 rows for a clean contraction width)."""
    emb = params["emb_weight"].astype(jnp.float32)        # (n_vocab, H)
    temb = params["type_emb_weight"].astype(jnp.float32)  # (5, H)
    n_vocab, H = emb.shape
    scale = jnp.float32(math.sqrt(H))

    k_real = n_vocab + temb.shape[0]
    k_pad = _round_up(k_real, 128)
    table = jnp.zeros((k_pad, H), jnp.float32)
    table = table.at[:n_vocab].set(emb * scale)
    table = table.at[n_vocab:k_real].set(temb * scale)

    return {
        "table": table.astype(jnp.bfloat16),                      # (k_pad, H)
        "dur_w": params["dur_w"].reshape(1, H).astype(jnp.float32),
        "dur_b": params["dur_b"].reshape(1, H).astype(jnp.float32),
        "n_vocab": n_vocab,
    }


def note_encoder_forward(note_tokens, note_durs, note_types, prepared,
                         *, tile_n=512):
    """note_tokens/note_types: [B, T] int32, note_durs: [B, T] f32 -> [B, T, H] f32."""
    table = prepared["table"]
    w = prepared["dur_w"]
    b = prepared["dur_b"]
    n_vocab = prepared["n_vocab"]

    B, T = note_tokens.shape
    K, H = table.shape
    N = B * T

    tn = min(tile_n, _round_up(N, 8))
    n_pad = _round_up(N, tn)
    grid = (n_pad // tn,)

    def _flat(x, dtype):
        x = x.reshape(N, 1).astype(dtype)
        if n_pad != N:
            # Pad rows use token/type 0 (zero rows) and dur 0; sliced off below.
            x = jnp.pad(x, ((0, n_pad - N), (0, 0)))
        return x

    tok2 = _flat(note_tokens, jnp.int32)
    typ2 = _flat(note_types, jnp.int32)
    dur2 = _flat(note_durs, jnp.float32)

    row_spec = pl.BlockSpec((tn, 1), lambda i: (i, 0))
    out = pl.pallas_call(
        functools.partial(_note_encoder_kernel, n_vocab=n_vocab),
        out_shape=jax.ShapeDtypeStruct((n_pad, H), jnp.float32),
        grid_spec=pltpu.PrefetchScalarGridSpec(
            num_scalar_prefetch=0,
            grid=grid,
            in_specs=[
                row_spec,                                 # tokens  (streamed)
                row_spec,                                 # types   (streamed)
                row_spec,                                 # durs    (streamed)
                pl.BlockSpec((K, H), lambda i: (0, 0)),   # stacked table (resident)
                pl.BlockSpec((1, H), lambda i: (0, 0)),   # dur weight    (resident)
                pl.BlockSpec((1, H), lambda i: (0, 0)),   # dur bias      (resident)
            ],
            out_specs=pl.BlockSpec((tn, H), lambda i: (i, 0)),
        ),
        compiler_params=pltpu.CompilerParams(
            dimension_semantics=("parallel",)),
    )(tok2, typ2, dur2, table, w, b)

    return out[:N].reshape(B, T, H)


def init_params(key, n_vocab, hidden_channels):
    """Deterministic synthetic init matching the PyTorch module's parameters."""
    k1, k2, k3, k4 = jax.random.split(key, 4)
    std = hidden_channels ** (-0.5)

    emb = jax.random.normal(k1, (n_vocab, hidden_channels), jnp.float32) * std
    temb = jax.random.normal(k2, (5, hidden_channels), jnp.float32) * std
    emb = emb.at[0].set(0.0)     # padding_idx=0
    temb = temb.at[0].set(0.0)   # padding_idx=0

    # nn.Linear(1, H): weight (H, 1) stored transposed as (1, H), bias (H,) as (1, H).
    dur_w = jax.random.uniform(k3, (1, hidden_channels), jnp.float32, -1.0, 1.0)
    dur_b = jax.random.uniform(k4, (1, hidden_channels), jnp.float32, -1.0, 1.0)

    return {"emb_weight": emb, "type_emb_weight": temb,
            "dur_w": dur_w, "dur_b": dur_b}


def _reference_forward(note_tokens, note_durs, note_types, params):
    """Pure-JAX f32 reference with the exact module semantics."""
    H = params["emb_weight"].shape[1]
    s = math.sqrt(H)
    x = params["emb_weight"][note_tokens] * s
    t = params["type_emb_weight"][note_types] * s
    d = note_durs[..., None] * params["dur_w"][0] + params["dur_b"][0]
    return x + d + t


def _reference_forward_bf16_tables(note_tokens, note_durs, note_types, params):
    """Same math but with the sqrt(H)-folded tables rounded to bf16, matching
    the kernel's table precision exactly (dur path stays f32)."""
    H = params["emb_weight"].shape[1]
    s = math.sqrt(H)
    emb = (params["emb_weight"] * s).astype(jnp.bfloat16).astype(jnp.float32)
    temb = (params["type_emb_weight"] * s).astype(jnp.bfloat16).astype(jnp.float32)
    x = emb[note_tokens]
    t = temb[note_types]
    d = note_durs[..., None] * params["dur_w"][0] + params["dur_b"][0]
    return x + d + t


if __name__ == "__main__":
    # Small but grid-exercising config: N = B*T = 1200 -> 3 grid steps of 512
    # rows (with a padded remainder); H = 128 keeps the output lane-dense.
    B, T, H, N_VOCAB = 2, 600, 128, 100

    key = jax.random.PRNGKey(0)
    kp, kt, kd, ky = jax.random.split(key, 4)

    params = init_params(kp, N_VOCAB, H)
    prepared = prepare_note_encoder_params(params)

    note_tokens = jax.random.randint(kt, (B, T), 0, N_VOCAB, dtype=jnp.int32)
    note_types = jax.random.randint(ky, (B, T), 0, 5, dtype=jnp.int32)
    note_durs = jax.random.uniform(kd, (B, T), jnp.float32, 0.0, 4.0)

    out = note_encoder_forward(note_tokens, note_durs, note_types, prepared)
    out = jax.block_until_ready(out)
    assert out.shape == (B, T, H), out.shape

    # Tight check against a reference that mirrors the kernel's bf16 table precision.
    ref_q = _reference_forward_bf16_tables(note_tokens, note_durs, note_types, params)
    assert jnp.allclose(out, ref_q, atol=1e-5, rtol=1e-5), "mismatch vs bf16-table reference"

    # Looser check against the exact f32 module semantics (only bf16 table rounding differs).
    ref = _reference_forward(note_tokens, note_durs, note_types, params)
    assert jnp.allclose(out, ref, atol=5e-2, rtol=5e-2), "mismatch vs f32 module reference"

    print("KERNEL_OK")
</pallas_src>

<mosaic_0001>
module attributes {stable_mosaic.version = 11 : i64} {
  func.func @_note_encoder_kernel(%arg0: i32, %arg1: memref<512x1xi32, #tpu.memory_space<vmem>>, %arg2: memref<512x1xi32, #tpu.memory_space<vmem>>, %arg3: memref<512x1xf32, #tpu.memory_space<vmem>>, %arg4: memref<128x128xbf16, #tpu.memory_space<vmem>>, %arg5: memref<1x128xf32, #tpu.memory_space<vmem>>, %arg6: memref<1x128xf32, #tpu.memory_space<vmem>>, %arg7: memref<512x128xf32, #tpu.memory_space<vmem>>) attributes {dimension_semantics = [#tpu.dimension_semantics<parallel>], iteration_bounds = array<i64: 3>, scalar_prefetch = 0 : i64, scratch_operands = 0 : i64, tpu.core_type = #tpu.core_type<tc>, window_params = [{transform_indices = @transform_0, window_bounds = array<i64: 512, 1>}, {transform_indices = @transform_1, window_bounds = array<i64: 512, 1>}, {transform_indices = @transform_2, window_bounds = array<i64: 512, 1>}, {pipeline_mode = #tpu.pipeline_mode<synchronous>, transform_indices = @transform_3, window_bounds = array<i64: 128, 128>}, {pipeline_mode = #tpu.pipeline_mode<synchronous>, transform_indices = @transform_4, window_bounds = array<i64: 1, 128>}, {pipeline_mode = #tpu.pipeline_mode<synchronous>, transform_indices = @transform_5, window_bounds = array<i64: 1, 128>}, {transform_indices = @transform_6, window_bounds = array<i64: 512, 128>}]} {
    %c0 = arith.constant 0 : index
    %c0_0 = arith.constant 0 : index
    %0 = vector.load %arg1[%c0, %c0_0] : memref<512x1xi32, #tpu.memory_space<vmem>>, vector<512x1xi32>
    %c0_1 = arith.constant 0 : index
    %c0_2 = arith.constant 0 : index
    %1 = vector.load %arg2[%c0_1, %c0_2] : memref<512x1xi32, #tpu.memory_space<vmem>>, vector<512x1xi32>
    %c100_i32 = arith.constant 100 : i32
    %2 = vector.broadcast %c100_i32 : i32 to vector<512x1xi32>
    %3 = arith.addi %1, %2 : vector<512x1xi32>
    %4 = tpu.iota {dimensions = array<i32: 1>} : vector<512x128xi32>
    %5 = vector.broadcast %0 : vector<512x1xi32> to vector<512x128xi32>
    %6 = arith.cmpi eq, %4, %5 : vector<512x128xi32>
    %7 = vector.broadcast %3 : vector<512x1xi32> to vector<512x128xi32>
    %8 = arith.cmpi eq, %4, %7 : vector<512x128xi32>
    %9 = arith.ori %6, %8 : vector<512x128xi1>
    %10 = arith.extui %9 : vector<512x128xi1> to vector<512x128xi32>
    %11 = arith.sitofp %10 : vector<512x128xi32> to vector<512x128xf32>
    %12 = arith.truncf %11 : vector<512x128xf32> to vector<512x128xbf16>
    %c0_3 = arith.constant 0 : index
    %c0_4 = arith.constant 0 : index
    %13 = vector.load %arg4[%c0_3, %c0_4] : memref<128x128xbf16, #tpu.memory_space<vmem>>, vector<128x128xbf16>
    %cst = arith.constant dense<0.000000e+00> : vector<512x128xf32>
    %14 = tpu.matmul %12, %13, %cst {dimension_numbers = #tpu.dot_dimension_numbers<[1], [0], [0], [1], [0, 0, 1, 1], [], []>} : vector<512x128xbf16>, vector<128x128xbf16>, vector<512x128xf32> -> vector<512x128xf32>
    %c0_5 = arith.constant 0 : index
    %c0_6 = arith.constant 0 : index
    %15 = vector.load %arg3[%c0_5, %c0_6] : memref<512x1xf32, #tpu.memory_space<vmem>>, vector<512x1xf32>
    %c0_7 = arith.constant 0 : index
    %c0_8 = arith.constant 0 : index
    %16 = vector.load %arg5[%c0_7, %c0_8] : memref<1x128xf32, #tpu.memory_space<vmem>>, vector<1x128xf32>
    %17 = vector.broadcast %15 : vector<512x1xf32> to vector<512x128xf32>
    %18 = vector.broadcast %16 : vector<1x128xf32> to vector<512x128xf32>
    %19 = arith.mulf %17, %18 : vector<512x128xf32>
    %c0_9 = arith.constant 0 : index
    %c0_10 = arith.constant 0 : index
    %20 = vector.load %arg6[%c0_9, %c0_10] : memref<1x128xf32, #tpu.memory_space<vmem>>, vector<1x128xf32>
    %21 = vector.broadcast %20 : vector<1x128xf32> to vector<512x128xf32>
    %22 = arith.addf %19, %21 : vector<512x128xf32>
    %23 = arith.addf %14, %22 : vector<512x128xf32>
    %c0_11 = arith.constant 0 : index
    %c0_12 = arith.constant 0 : index
    %24 = vector.load %arg7[%c0_11, %c0_12] : memref<512x128xf32, #tpu.memory_space<vmem>>, vector<512x128xf32>
    tpu.vector_store %arg7[%c0_11, %c0_12], %23 {strides = array<i32>} : memref<512x128xf32, #tpu.memory_space<vmem>>, vector<512x128xf32>,
    return
  }
  func.func @transform_0(%arg0: i32) -> (i32, i32) {
    %c0_i32 = arith.constant 0 : i32
    %c0_i32_0 = arith.constant 0 : i32
    return %arg0, %c0_i32 : i32, i32
  }
  func.func @transform_1(%arg0: i32) -> (i32, i32) {
    %c0_i32 = arith.constant 0 : i32
    %c0_i32_0 = arith.constant 0 : i32
    return %arg0, %c0_i32 : i32, i32
  }
  func.func @transform_2(%arg0: i32) -> (i32, i32) {
    %c0_i32 = arith.constant 0 : i32
    %c0_i32_0 = arith.constant 0 : i32
    return %arg0, %c0_i32 : i32, i32
  }
  func.func @transform_3(%arg0: i32) -> (i32, i32) {
    %c0_i32 = arith.constant 0 : i32
    %c0_i32_0 = arith.constant 0 : i32
    %c0_i32_1 = arith.constant 0 : i32
    return %c0_i32, %c0_i32_0 : i32, i32
  }
  func.func @transform_4(%arg0: i32) -> (i32, i32) {
    %c0_i32 = arith.constant 0 : i32
    %c0_i32_0 = arith.constant 0 : i32
    %c0_i32_1 = arith.constant 0 : i32
    return %c0_i32, %c0_i32_0 : i32, i32
  }
  func.func @transform_5(%arg0: i32) -> (i32, i32) {
    %c0_i32 = arith.constant 0 : i32
    %c0_i32_0 = arith.constant 0 : i32
    %c0_i32_1 = arith.constant 0 : i32
    return %c0_i32, %c0_i32_0 : i32, i32
  }
  func.func @transform_6(%arg0: i32) -> (i32, i32) {
    %c0_i32 = arith.constant 0 : i32
    %c0_i32_0 = arith.constant 0 : i32
    return %arg0, %c0_i32 : i32, i32
  }
}

</mosaic_0001>

<llo_original>
// kernel: tpu_custom_call.1
$region0: #{tpu_custom_call.1}
  #allocation0 [shape = 'u32[]', space=smem, size = 0x4, offset = 0x4, fixed_abs, tag = 'smem constant byte address 0x4 - core index']
  #allocation1 [shape = 'u32[72,128]{1,0:T(1,128)}', space=vmem, size = 0x9000, scoped, tag = 'internal scratch']
  %s0 = inlined_call_operand.vmem [shape: s32[1536,1], index: 0, kind: input, shape index: {}]
  %s1 = inlined_call_operand.vmem [shape: s32[1536,1], index: 1, kind: input, shape index: {}]
  %s2 = inlined_call_operand.vmem [shape: f32[1536,1], index: 2, kind: input, shape index: {}]
  %s3 = inlined_call_operand.vmem [shape: bf16[128,128], index: 3, kind: input, shape index: {}]
  %s4 = inlined_call_operand.vmem [shape: f32[1,128], index: 4, kind: input, shape index: {}]
  %s5 = inlined_call_operand.vmem [shape: f32[1,128], index: 5, kind: input, shape index: {}]
  %s6 = inlined_call_operand.hbm [shape: f32[1536,128], index: 6, kind: output, shape index: {}]
  %s7 = sld [smem:[#allocation0]]
  $region57: #{tpu_custom_call.1} parent=0
    _
  %s9 = ssub.s32 1, %s7
  %s10 = scalar_select 0, %s9, %s7
  $region1: #{tpu_custom_call.1} parent=0
    #allocation2 [shape = 'u8[524288]{0}', space=vmem, size = 0x80000, scoped, tag = 'output window, operand 0']
    #allocation3 [shape = 's32[2]{0}', space=sflag, size = 0x8, scoped, tag = 'scoped memory for tpu_custom_call.1']
    %11 = vsyncpa [#allocation3], 0
    %s12 = scalar_lea.sflag [#allocation3], 1
    %13 = vsyncpa %s12, 0
    loop: start=0, step=1, limit=5
    $region2: #{tpu_custom_call.1} parent=1 // loop_pre_header
      _
    $region3: #{tpu_custom_call.1} parent=1 // loop_header
      %s15 = sphi 0, %s19
      %p16 = scmp.ge.s32.totalorder %s15, 5
      %s25 = sphi 0, %s27
      %s28 = sphi 0, %s25
      %s29 = sphi 0, %s28
      %s45 = sphi 0, %s29
      %s51 = sphi 0, %s53
      %s54 = sphi 0, %s51
      %s55 = sphi 0, %s54
      %s71 = sphi 0, %s55
      %s77 = sphi 0, %s79
      %s80 = sphi 0, %s77
      %s81 = sphi 0, %s80
      %s97 = sphi 0, %s81
      %s101 = sphi 0, %s101
      %s103 = sphi 0, %s101
      %s104 = sphi 0, %s103
      %s118 = sphi 0, %s104
      %s122 = sphi 0, %s122
      %s124 = sphi 0, %s122
      %s125 = sphi 0, %s124
      %s139 = sphi 0, %s125
      %s143 = sphi 0, %s143
      %s145 = sphi 0, %s143
      %s146 = sphi 0, %s145
      %s160 = sphi 0, %s146
      %s166 = sphi 0, %s168
      %s169 = sphi 0, %s166
      %s170 = sphi 0, %s169
      %s186 = sphi 0, %s170
    $region4: #{tpu_custom_call.1} parent=1 // loop_header_branch
      %18 = sbr.rel (%p16) target = $region8
    $region5: #{tpu_custom_call.1} parent=1 // loop_body
      %s20 = ssub.s32 %s15, 1
      %s21 = ssub.s32 %s15, 2
      %s22 = sadd.s32 %s15, 1
      %s23 = ssub.s32 %s15, %s22
      %p24 = scmp.eq.s32.totalorder %s23, 0
      %s26 = sadd.s32 %s25, 1
      %s27 = scalar_select %p24, %s25, %s26
      %p30 = pneg %p24
      %p31 = scmp.eq.s32.totalorder %s15, 2
      %p32 = por %p30, %p31
      %p33 = scmp.ne.s32.totalorder %s25, %s28
      %p34 = scmp.eq.s32.totalorder %s15, 0
      %p35 = por %p33, %p34
      %p36 = scmp.ne.s32.totalorder %s25, %s28
      %p37 = scmp.eq.s32.totalorder %s20, 2
      %p38 = por %p36, %p37
      %p39 = scmp.ne.s32.totalorder %s28, %s29
      %p40 = scmp.eq.s32.totalorder %s20, 0
      %p41 = por %p39, %p40
      %p42 = scmp.ne.s32.totalorder %s28, %s29
      %p43 = scmp.eq.s32.totalorder %s21, 2
      %p44 = por %p42, %p43
      %p46 = scmp.ne.s32.totalorder %s29, %s45
      %p47 = scmp.eq.s32.totalorder %s21, 0
      %p48 = por %p46, %p47
      %s49 = ssub.s32 %s15, %s22
      %p50 = scmp.eq.s32.totalorder %s49, 0
      %s52 = sadd.s32 %s51, 1
      %s53 = scalar_select %p50, %s51, %s52
      %p56 = pneg %p50
      %p57 = scmp.eq.s32.totalorder %s15, 2
      %p58 = por %p56, %p57
      %p59 = scmp.ne.s32.totalorder %s51, %s54
      %p60 = scmp.eq.s32.totalorder %s15, 0
      %p61 = por %p59, %p60
      %p62 = scmp.ne.s32.totalorder %s51, %s54
      %p63 = scmp.eq.s32.totalorder %s20, 2
      %p64 = por %p62, %p63
      %p65 = scmp.ne.s32.totalorder %s54, %s55
      %p66 = scmp.eq.s32.totalorder %s20, 0
      %p67 = por %p65, %p66
      %p68 = scmp.ne.s32.totalorder %s54, %s55
      %p69 = scmp.eq.s32.totalorder %s21, 2
      %p70 = por %p68, %p69
      %p72 = scmp.ne.s32.totalorder %s55, %s71
      %p73 = scmp.eq.s32.totalorder %s21, 0
      %p74 = por %p72, %p73
      %s75 = ssub.s32 %s15, %s22
      %p76 = scmp.eq.s32.totalorder %s75, 0
      %s78 = sadd.s32 %s77, 1
      %s79 = scalar_select %p76, %s77, %s78
      %p82 = pneg %p76
      %p83 = scmp.eq.s32.totalorder %s15, 2
      %p84 = por %p82, %p83
      %p85 = scmp.ne.s32.totalorder %s77, %s80
      %p86 = scmp.eq.s32.totalorder %s15, 0
      %p87 = por %p85, %p86
      %p88 = scmp.ne.s32.totalorder %s77, %s80
      %p89 = scmp.eq.s32.totalorder %s20, 2
      %p90 = por %p88, %p89
      %p91 = scmp.ne.s32.totalorder %s80, %s81
      %p92 = scmp.eq.s32.totalorder %s20, 0
      %p93 = por %p91, %p92
      %p94 = scmp.ne.s32.totalorder %s80, %s81
      %p95 = scmp.eq.s32.totalorder %s21, 2
      %p96 = por %p94, %p95
      %p98 = scmp.ne.s32.totalorder %s81, %s97
      %p99 = scmp.eq.s32.totalorder %s21, 0
      %p100 = por %p98, %p99
      %s102 = sadd.s32 %s101, 1
      %p105 = scmp.eq.s32.totalorder %s15, 2
      %p106 = scmp.ne.s32.totalorder %s101, %s103
      %p107 = scmp.eq.s32.totalorder %s15, 0
      %p108 = por %p106, %p107
      %p109 = scmp.ne.s32.totalorder %s101, %s103
      %p110 = scmp.eq.s32.totalorder %s20, 2
      %p111 = por %p109, %p110
      %p112 = scmp.ne.s32.totalorder %s103, %s104
      %p113 = scmp.eq.s32.totalorder %s20, 0
      %p114 = por %p112, %p113
      %p115 = scmp.ne.s32.totalorder %s103, %s104
      %p116 = scmp.eq.s32.totalorder %s21, 2
      %p117 = por %p115, %p116
      %p119 = scmp.ne.s32.totalorder %s104, %s118
      %p120 = scmp.eq.s32.totalorder %s21, 0
      %p121 = por %p119, %p120
      %s123 = sadd.s32 %s122, 1
      %p126 = scmp.eq.s32.totalorder %s15, 2
      %p127 = scmp.ne.s32.totalorder %s122, %s124
      %p128 = scmp.eq.s32.totalorder %s15, 0
      %p129 = por %p127, %p128
      %p130 = scmp.ne.s32.totalorder %s122, %s124
      %p131 = scmp.eq.s32.totalorder %s20, 2
      %p132 = por %p130, %p131
      %p133 = scmp.ne.s32.totalorder %s124, %s125
      %p134 = scmp.eq.s32.totalorder %s20, 0
      %p135 = por %p133, %p134
      %p136 = scmp.ne.s32.totalorder %s124, %s125
      %p137 = scmp.eq.s32.totalorder %s21, 2
      %p138 = por %p136, %p137
      %p140 = scmp.ne.s32.totalorder %s125, %s139
      %p141 = scmp.eq.s32.totalorder %s21, 0
      %p142 = por %p140, %p141
      %s144 = sadd.s32 %s143, 1
      %p147 = scmp.eq.s32.totalorder %s15, 2
      %p148 = scmp.ne.s32.totalorder %s143, %s145
      %p149 = scmp.eq.s32.totalorder %s15, 0
      %p150 = por %p148, %p149
      %p151 = scmp.ne.s32.totalorder %s143, %s145
      %p152 = scmp.eq.s32.totalorder %s20, 2
      %p153 = por %p151, %p152
      %p154 = scmp.ne.s32.totalorder %s145, %s146
      %p155 = scmp.eq.s32.totalorder %s20, 0
      %p156 = por %p154, %p155
      %p157 = scmp.ne.s32.totalorder %s145, %s146
      %p158 = scmp.eq.s32.totalorder %s21, 2
      %p159 = por %p157, %p158
      %p161 = scmp.ne.s32.totalorder %s146, %s160
      %p162 = scmp.eq.s32.totalorder %s21, 0
      %p163 = por %p161, %p162
      %s164 = ssub.s32 %s15, %s22
      %p165 = scmp.eq.s32.totalorder %s164, 0
      %s167 = sadd.s32 %s166, 1
      %s168 = scalar_select %p165, %s166, %s167
      %p171 = pneg %p165
      %p172 = scmp.eq.s32.totalorder %s15, 2
      %p173 = por %p171, %p172
      %p174 = scmp.ne.s32.totalorder %s166, %s169
      %p175 = scmp.eq.s32.totalorder %s15, 0
      %p176 = por %p174, %p175
      %p177 = scmp.ne.s32.totalorder %s166, %s169
      %p178 = scmp.eq.s32.totalorder %s20, 2
      %p179 = por %p177, %p178
      %p180 = scmp.ne.s32.totalorder %s169, %s170
      %p181 = scmp.eq.s32.totalorder %s20, 0
      %p182 = por %p180, %p181
      %p183 = scmp.ne.s32.totalorder %s169, %s170
      %p184 = scmp.eq.s32.totalorder %s21, 2
      %p185 = por %p183, %p184
      %p187 = scmp.ne.s32.totalorder %s170, %s186
      %p188 = scmp.eq.s32.totalorder %s21, 0
      %p189 = por %p187, %p188
      %p190 = scmp.le.s32.totalorder 1, %s15
      %p191 = scmp.lt.s32.totalorder %s15, 4
      %p192 = pnand %p190, %p191
      %p193 = pneg %p192
      // Predicated region
      $region9: #{tpu_custom_call.1} parent=5 // pred_check
        _
      $region10: #{tpu_custom_call.1} parent=5 // pred_check_branch
        %195 = sbr.rel (%p192) target = $region12
      $region11: #{tpu_custom_call.1} parent=5 // pred_region
        %s196 = ssub.s32 %s15, 1
        // Predicated region
        $region13: #{tpu_custom_call.1} parent=11 // pred_check
          %p197 = pneg %p114
        $region14: #{tpu_custom_call.1} parent=11 // pred_check_branch
          %199 = sbr.rel (%p197) target = $region16
        $region15: #{tpu_custom_call.1} parent=11 // pred_region
          _
        $region16: #{tpu_custom_call.1} parent=11 // pred_fallthru
          _
        // Predicated region
        $region17: #{tpu_custom_call.1} parent=11 // pred_check
          %p200 = pneg %p135
        $region18: #{tpu_custom_call.1} parent=11 // pred_check_branch
          %202 = sbr.rel (%p200) target = $region20
        $region19: #{tpu_custom_call.1} parent=11 // pred_region
          _
        $region20: #{tpu_custom_call.1} parent=11 // pred_fallthru
          _
        // Predicated region
        $region21: #{tpu_custom_call.1} parent=11 // pred_check
          %p203 = pneg %p156
        $region22: #{tpu_custom_call.1} parent=11 // pred_check_branch
          %205 = sbr.rel (%p203) target = $region24
        $region23: #{tpu_custom_call.1} parent=11 // pred_region
          _
        $region24: #{tpu_custom_call.1} parent=11 // pred_fallthru
          _
      $region12: #{tpu_custom_call.1} parent=5 // pred_fallthru
        _
      %p206 = scmp.lt.s32.totalorder %s15, 3
      // Predicated region
      $region25: #{tpu_custom_call.1} parent=5 // pred_check
        %p207 = pneg %p206
      $region26: #{tpu_custom_call.1} parent=5 // pred_check_branch
        %209 = sbr.rel (%p207) target = $region28
      $region27: #{tpu_custom_call.1} parent=5 // pred_region
        // Predicated region
        $region29: #{tpu_custom_call.1} parent=27 // pred_check
          %p210 = pneg %p35
        $region30: #{tpu_custom_call.1} parent=27 // pred_check_branch
          %212 = sbr.rel (%p210) target = $region32
        $region31: #{tpu_custom_call.1} parent=27 // pred_region
          %s213 = smul.u32 64, %s15
          %p214 = scmp.lt.s32.totalorder %s213, 191
          %s215 = scalar_select %p214, %s213, 191
          %s216 = smul.addr %s215, 8
          %s217 = scalar_lea.vmem %s0, %s216
          %s218 = smul.u32 64, %s15
        $region32: #{tpu_custom_call.1} parent=27 // pred_fallthru
          _
        // Predicated region
        $region33: #{tpu_custom_call.1} parent=27 // pred_check
          %p219 = pneg %p61
        $region34: #{tpu_custom_call.1} parent=27 // pred_check_branch
          %221 = sbr.rel (%p219) target = $region36
        $region35: #{tpu_custom_call.1} parent=27 // pred_region
          %s222 = smul.u32 64, %s15
          %p223 = scmp.lt.s32.totalorder %s222, 191
          %s224 = scalar_select %p223, %s222, 191
          %s225 = smul.addr %s224, 8
          %s226 = scalar_lea.vmem %s1, %s225
          %s227 = smul.u32 64, %s15
        $region36: #{tpu_custom_call.1} parent=27 // pred_fallthru
          _
        // Predicated region
        $region37: #{tpu_custom_call.1} parent=27 // pred_check
          %p228 = pneg %p87
        $region38: #{tpu_custom_call.1} parent=27 // pred_check_branch
          %230 = sbr.rel (%p228) target = $region40
        $region39: #{tpu_custom_call.1} parent=27 // pred_region
          %s231 = smul.u32 64, %s15
          %p232 = scmp.lt.s32.totalorder %s231, 191
          %s233 = scalar_select %p232, %s231, 191
          %s234 = smul.addr %s233, 8
          %s235 = scalar_lea.vmem %s2, %s234
          %s236 = smul.u32 64, %s15
        $region40: #{tpu_custom_call.1} parent=27 // pred_fallthru
          _
      $region28: #{tpu_custom_call.1} parent=5 // pred_fallthru
        _
      %p237 = scmp.le.s32.totalorder 1, %s15
      %p238 = scmp.lt.s32.totalorder %s15, 4
      %p239 = pnand %p237, %p238
      %p240 = pneg %p239
      // Predicated region
      $region41: #{tpu_custom_call.1} parent=5 // pred_check
        _
      $region42: #{tpu_custom_call.1} parent=5 // pred_check_branch
        %242 = sbr.rel (%p239) target = $region44
      $region43: #{tpu_custom_call.1} parent=5 // pred_region
        %s243 = ssub.s32 %s15, 1
        %s244 = smul.u32 64, %s20
        %p245 = scmp.lt.s32.totalorder %s244, 191
        %s246 = scalar_select %p245, %s244, 191
        %s247 = smul.addr %s246, 8
        %s248 = scalar_lea.vmem %s0, %s247
        %p249 = pneg %p41
        %p250 = pneg %p38
        %s251 = smul.u32 64, %s20
        %p252 = scmp.lt.s32.totalorder %s251, 191
        %s253 = scalar_select %p252, %s251, 191
        %s254 = smul.addr %s253, 8
        %s255 = scalar_lea.vmem %s1, %s254
        %p256 = pneg %p67
        %p257 = pneg %p64
        %s258 = smul.u32 64, %s20
        %p259 = scmp.lt.s32.totalorder %s258, 191
        %s260 = scalar_select %p259, %s258, 191
        %s261 = smul.addr %s260, 8
        %s262 = scalar_lea.vmem %s2, %s261
        %p263 = pneg %p93
        %p264 = pneg %p90
        %p265 = pneg %p114
        %p266 = pneg %p111
        %p267 = pneg %p135
        %p268 = pneg %p132
        %p269 = pneg %p156
        %p270 = pneg %p153
        %p271 = pneg %p182
        %p272 = pneg %p179
        %s273 = sand.u32 %s169, 1
        %s274 = scalar_lea.sflag [#allocation3], %s273
        %s275 = sand.u32 %s169, 1
        %s276 = smul.addr %s275, 512
        %s277 = scalar_lea.vmem [#allocation2], %s276
        %s278 = smul.u32 64, %s20
        %p279 = scmp.lt.s32.totalorder %s278, 191
        %s280 = scalar_select %p279, %s278, 191
        %s281 = smul.addr %s280, 8
        %s282 = scalar_lea.vmem %s0, %s281
        %s283 = smul.u32 64, %s20
        %s284 = smul.u32 64, %s20
        %p285 = scmp.lt.s32.totalorder %s284, 191
        %s286 = scalar_select %p285, %s284, 191
        %s287 = smul.addr %s286, 8
        %s288 = scalar_lea.vmem %s1, %s287
        %s289 = smul.u32 64, %s20
        %s290 = smul.u32 64, %s20
        %p291 = scmp.lt.s32.totalorder %s290, 191
        %s292 = scalar_select %p291, %s290, 191
        %s293 = smul.addr %s292, 8
        %s294 = scalar_lea.vmem %s2, %s293
        %s295 = smul.u32 64, %s20
        %s296 = smul.u32 64, %s20
        %v297 = vld [vmem:[%s282] sm:$0xff]
        %v298 = vld [vmem:[%s282 + $0x8] sm:$0xff]
        %v299 = vld [vmem:[%s282 + $0x10] sm:$0xff]
        %v300 = vld [vmem:[%s282 + $0x18] sm:$0xff]
        %v301 = vld [vmem:[%s282 + $0x20] sm:$0xff]
        %v302 = vld [vmem:[%s282 + $0x28] sm:$0xff]
        %v303 = vld [vmem:[%s282 + $0x30] sm:$0xff]
        %v304 = vld [vmem:[%s282 + $0x38] sm:$0xff]
        %v305 = vld [vmem:[%s282 + $0x40] sm:$0xff]
        %v306 = vld [vmem:[%s282 + $0x48] sm:$0xff]
        %v307 = vld [vmem:[%s282 + $0x50] sm:$0xff]
        %v308 = vld [vmem:[%s282 + $0x58] sm:$0xff]
        %v309 = vld [vmem:[%s282 + $0x60] sm:$0xff]
        %v310 = vld [vmem:[%s282 + $0x68] sm:$0xff]
        %v311 = vld [vmem:[%s282 + $0x70] sm:$0xff]
        %v312 = vld [vmem:[%s282 + $0x78] sm:$0xff]
        %v313 = vld [vmem:[%s282 + $0x80] sm:$0xff]
        %v314 = vld [vmem:[%s282 + $0x88] sm:$0xff]
        %v315 = vld [vmem:[%s282 + $0x90] sm:$0xff]
        %v316 = vld [vmem:[%s282 + $0x98] sm:$0xff]
        %v317 = vld [vmem:[%s282 + $0xa0] sm:$0xff]
        %v318 = vld [vmem:[%s282 + $0xa8] sm:$0xff]
        %v319 = vld [vmem:[%s282 + $0xb0] sm:$0xff]
        %v320 = vld [vmem:[%s282 + $0xb8] sm:$0xff]
        %v321 = vld [vmem:[%s282 + $0xc0] sm:$0xff]
        %v322 = vld [vmem:[%s282 + $0xc8] sm:$0xff]
        %v323 = vld [vmem:[%s282 + $0xd0] sm:$0xff]
        %v324 = vld [vmem:[%s282 + $0xd8] sm:$0xff]
        %v325 = vld [vmem:[%s282 + $0xe0] sm:$0xff]
        %v326 = vld [vmem:[%s282 + $0xe8] sm:$0xff]
        %v327 = vld [vmem:[%s282 + $0xf0] sm:$0xff]
        %v328 = vld [vmem:[%s282 + $0xf8] sm:$0xff]
        %v329 = vld [vmem:[%s282 + $0x100] sm:$0xff]
        %v330 = vld [vmem:[%s282 + $0x108] sm:$0xff]
        %v331 = vld [vmem:[%s282 + $0x110] sm:$0xff]
        %v332 = vld [vmem:[%s282 + $0x118] sm:$0xff]
        %v333 = vld [vmem:[%s282 + $0x120] sm:$0xff]
        %v334 = vld [vmem:[%s282 + $0x128] sm:$0xff]
        %v335 = vld [vmem:[%s282 + $0x130] sm:$0xff]
        %v336 = vld [vmem:[%s282 + $0x138] sm:$0xff]
        %v337 = vld [vmem:[%s282 + $0x140] sm:$0xff]
        %v338 = vld [vmem:[%s282 + $0x148] sm:$0xff]
        %v339 = vld [vmem:[%s282 + $0x150] sm:$0xff]
        %v340 = vld [vmem:[%s282 + $0x158] sm:$0xff]
        %v341 = vld [vmem:[%s282 + $0x160] sm:$0xff]
        %v342 = vld [vmem:[%s282 + $0x168] sm:$0xff]
        %v343 = vld [vmem:[%s282 + $0x170] sm:$0xff]
        %v344 = vld [vmem:[%s282 + $0x178] sm:$0xff]
        %v345 = vld [vmem:[%s282 + $0x180] sm:$0xff]
        %v346 = vld [vmem:[%s282 + $0x188] sm:$0xff]
        %v347 = vld [vmem:[%s282 + $0x190] sm:$0xff]
        %v348 = vld [vmem:[%s282 + $0x198] sm:$0xff]
        %v349 = vld [vmem:[%s282 + $0x1a0] sm:$0xff]
        %v350 = vld [vmem:[%s282 + $0x1a8] sm:$0xff]
        %v351 = vld [vmem:[%s282 + $0x1b0] sm:$0xff]
        %v352 = vld [vmem:[%s282 + $0x1b8] sm:$0xff]
        %v353 = vld [vmem:[%s282 + $0x1c0] sm:$0xff]
        %v354 = vld [vmem:[%s282 + $0x1c8] sm:$0xff]
        %v355 = vld [vmem:[%s282 + $0x1d0] sm:$0xff]
        %v356 = vld [vmem:[%s282 + $0x1d8] sm:$0xff]
        %v357 = vld [vmem:[%s282 + $0x1e0] sm:$0xff]
        %v358 = vld [vmem:[%s282 + $0x1e8] sm:$0xff]
        %v359 = vld [vmem:[%s282 + $0x1f0] sm:$0xff]
        %v360 = vld [vmem:[%s282 + $0x1f8] sm:$0xff]
        %v361 = vld [vmem:[%s288] sm:$0xff]
        %v362 = vld [vmem:[%s288 + $0x8] sm:$0xff]
        %v363 = vld [vmem:[%s288 + $0x10] sm:$0xff]
        %v364 = vld [vmem:[%s288 + $0x18] sm:$0xff]
        %v365 = vld [vmem:[%s288 + $0x20] sm:$0xff]
        %v366 = vld [vmem:[%s288 + $0x28] sm:$0xff]
        %v367 = vld [vmem:[%s288 + $0x30] sm:$0xff]
        %v368 = vld [vmem:[%s288 + $0x38] sm:$0xff]
        %v369 = vld [vmem:[%s288 + $0x40] sm:$0xff]
        %v370 = vld [vmem:[%s288 + $0x48] sm:$0xff]
        %v371 = vld [vmem:[%s288 + $0x50] sm:$0xff]
        %v372 = vld [vmem:[%s288 + $0x58] sm:$0xff]
        %v373 = vld [vmem:[%s288 + $0x60] sm:$0xff]
        %v374 = vld [vmem:[%s288 + $0x68] sm:$0xff]
        %v375 = vld [vmem:[%s288 + $0x70] sm:$0xff]
        %v376 = vld [vmem:[%s288 + $0x78] sm:$0xff]
        %v377 = vld [vmem:[%s288 + $0x80] sm:$0xff]
        %v378 = vld [vmem:[%s288 + $0x88] sm:$0xff]
        %v379 = vld [vmem:[%s288 + $0x90] sm:$0xff]
        %v380 = vld [vmem:[%s288 + $0x98] sm:$0xff]
        %v381 = vld [vmem:[%s288 + $0xa0] sm:$0xff]
        %v382 = vld [vmem:[%s288 + $0xa8] sm:$0xff]
        %v383 = vld [vmem:[%s288 + $0xb0] sm:$0xff]
        %v384 = vld [vmem:[%s288 + $0xb8] sm:$0xff]
        %v385 = vld [vmem:[%s288 + $0xc0] sm:$0xff]
        %v386 = vld [vmem:[%s288 + $0xc8] sm:$0xff]
        %v387 = vld [vmem:[%s288 + $0xd0] sm:$0xff]
        %v388 = vld [vmem:[%s288 + $0xd8] sm:$0xff]
        %v389 = vld [vmem:[%s288 + $0xe0] sm:$0xff]
        %v390 = vld [vmem:[%s288 + $0xe8] sm:$0xff]
        %v391 = vld [vmem:[%s288 + $0xf0] sm:$0xff]
        %v392 = vld [vmem:[%s288 + $0xf8] sm:$0xff]
        %v393 = vld [vmem:[%s288 + $0x100] sm:$0xff]
        %v394 = vld [vmem:[%s288 + $0x108] sm:$0xff]
        %v395 = vld [vmem:[%s288 + $0x110] sm:$0xff]
        %v396 = vld [vmem:[%s288 + $0x118] sm:$0xff]
        %v397 = vld [vmem:[%s288 + $0x120] sm:$0xff]
        %v398 = vld [vmem:[%s288 + $0x128] sm:$0xff]
        %v399 = vld [vmem:[%s288 + $0x130] sm:$0xff]
        %v400 = vld [vmem:[%s288 + $0x138] sm:$0xff]
        %v401 = vld [vmem:[%s288 + $0x140] sm:$0xff]
        %v402 = vld [vmem:[%s288 + $0x148] sm:$0xff]
        %v403 = vld [vmem:[%s288 + $0x150] sm:$0xff]
        %v404 = vld [vmem:[%s288 + $0x158] sm:$0xff]
        %v405 = vld [vmem:[%s288 + $0x160] sm:$0xff]
        %v406 = vld [vmem:[%s288 + $0x168] sm:$0xff]
        %v407 = vld [vmem:[%s288 + $0x170] sm:$0xff]
        %v408 = vld [vmem:[%s288 + $0x178] sm:$0xff]
        %v409 = vld [vmem:[%s288 + $0x180] sm:$0xff]
        %v410 = vld [vmem:[%s288 + $0x188] sm:$0xff]
        %v411 = vld [vmem:[%s288 + $0x190] sm:$0xff]
        %v412 = vld [vmem:[%s288 + $0x198] sm:$0xff]
        %v413 = vld [vmem:[%s288 + $0x1a0] sm:$0xff]
        %v414 = vld [vmem:[%s288 + $0x1a8] sm:$0xff]
        %v415 = vld [vmem:[%s288 + $0x1b0] sm:$0xff]
        %v416 = vld [vmem:[%s288 + $0x1b8] sm:$0xff]
        %v417 = vld [vmem:[%s288 + $0x1c0] sm:$0xff]
        %v418 = vld [vmem:[%s288 + $0x1c8] sm:$0xff]
        %v419 = vld [vmem:[%s288 + $0x1d0] sm:$0xff]
        %v420 = vld [vmem:[%s288 + $0x1d8] sm:$0xff]
        %v421 = vld [vmem:[%s288 + $0x1e0] sm:$0xff]
        %v422 = vld [vmem:[%s288 + $0x1e8] sm:$0xff]
        %v423 = vld [vmem:[%s288 + $0x1f0] sm:$0xff]
        %v424 = vld [vmem:[%s288 + $0x1f8] sm:$0xff]
        %v425 = vadd.s32 %v361, 100
        %v426 = vadd.s32 %v362, 100
        %v427 = vadd.s32 %v363, 100
        %v428 = vadd.s32 %v364, 100
        %v429 = vadd.s32 %v365, 100
        %v430 = vadd.s32 %v366, 100
        %v431 = vadd.s32 %v367, 100
        %v432 = vadd.s32 %v368, 100
        %v433 = vadd.s32 %v369, 100
        %v434 = vadd.s32 %v370, 100
        %v435 = vadd.s32 %v371, 100
        %v436 = vadd.s32 %v372, 100
        %v437 = vadd.s32 %v373, 100
        %v438 = vadd.s32 %v374, 100
        %v439 = vadd.s32 %v375, 100
        %v440 = vadd.s32 %v376, 100
        %v441 = vadd.s32 %v377, 100
        %v442 = vadd.s32 %v378, 100
        %v443 = vadd.s32 %v379, 100
        %v444 = vadd.s32 %v380, 100
        %v445 = vadd.s32 %v381, 100
        %v446 = vadd.s32 %v382, 100
        %v447 = vadd.s32 %v383, 100
        %v448 = vadd.s32 %v384, 100
        %v449 = vadd.s32 %v385, 100
        %v450 = vadd.s32 %v386, 100
        %v451 = vadd.s32 %v387, 100
        %v452 = vadd.s32 %v388, 100
        %v453 = vadd.s32 %v389, 100
        %v454 = vadd.s32 %v390, 100
        %v455 = vadd.s32 %v391, 100
        %v456 = vadd.s32 %v392, 100
        %v457 = vadd.s32 %v393, 100
        %v458 = vadd.s32 %v394, 100
        %v459 = vadd.s32 %v395, 100
        %v460 = vadd.s32 %v396, 100
        %v461 = vadd.s32 %v397, 100
        %v462 = vadd.s32 %v398, 100
        %v463 = vadd.s32 %v399, 100
        %v464 = vadd.s32 %v400, 100
        %v465 = vadd.s32 %v401, 100
        %v466 = vadd.s32 %v402, 100
        %v467 = vadd.s32 %v403, 100
        %v468 = vadd.s32 %v404, 100
        %v469 = vadd.s32 %v405, 100
        %v470 = vadd.s32 %v406, 100
        %v471 = vadd.s32 %v407, 100
        %v472 = vadd.s32 %v408, 100
        %v473 = vadd.s32 %v409, 100
        %v474 = vadd.s32 %v410, 100
        %v475 = vadd.s32 %v411, 100
        %v476 = vadd.s32 %v412, 100
        %v477 = vadd.s32 %v413, 100
        %v478 = vadd.s32 %v414, 100
        %v479 = vadd.s32 %v415, 100
        %v480 = vadd.s32 %v416, 100
        %v481 = vadd.s32 %v417, 100
        %v482 = vadd.s32 %v418, 100
        %v483 = vadd.s32 %v419, 100
        %v484 = vadd.s32 %v420, 100
        %v485 = vadd.s32 %v421, 100
        %v486 = vadd.s32 %v422, 100
        %v487 = vadd.s32 %v423, 100
        %v488 = vadd.s32 %v424, 100
        %v489 = vlaneseq
        %v490 = vand.u32 %v489, 127
        %491 = vset.pattern.permute.xlu0 0
        %492 = vperm.xlu0 %491, %v297
        %v493 = vpop.permute.xlu0 %492
        %494 = vset.pattern.permute.xlu0 0
        %495 = vperm.xlu0 %494, %v298
        %v496 = vpop.permute.xlu0 %495
        %497 = vset.pattern.permute.xlu0 0
        %498 = vperm.xlu0 %497, %v299
        %v499 = vpop.permute.xlu0 %498
        %500 = vset.pattern.permute.xlu0 0
        %501 = vperm.xlu0 %500, %v300
        %v502 = vpop.permute.xlu0 %501
        %503 = vset.pattern.permute.xlu0 0
        %504 = vperm.xlu0 %503, %v301
        %v505 = vpop.permute.xlu0 %504
        %506 = vset.pattern.permute.xlu0 0
        %507 = vperm.xlu0 %506, %v302
        %v508 = vpop.permute.xlu0 %507
        %509 = vset.pattern.permute.xlu0 0
        %510 = vperm.xlu0 %509, %v303
        %v511 = vpop.permute.xlu0 %510
        %512 = vset.pattern.permute.xlu0 0
        %513 = vperm.xlu0 %512, %v304
        %v514 = vpop.permute.xlu0 %513
        %515 = vset.pattern.permute.xlu0 0
        %516 = vperm.xlu0 %515, %v305
        %v517 = vpop.permute.xlu0 %516
        %518 = vset.pattern.permute.xlu0 0
        %519 = vperm.xlu0 %518, %v306
        %v520 = vpop.permute.xlu0 %519
        %521 = vset.pattern.permute.xlu0 0
        %522 = vperm.xlu0 %521, %v307
        %v523 = vpop.permute.xlu0 %522
        %524 = vset.pattern.permute.xlu0 0
        %525 = vperm.xlu0 %524, %v308
        %v526 = vpop.permute.xlu0 %525
        %527 = vset.pattern.permute.xlu0 0
        %528 = vperm.xlu0 %527, %v309
        %v529 = vpop.permute.xlu0 %528
        %530 = vset.pattern.permute.xlu0 0
        %531 = vperm.xlu0 %530, %v310
        %v532 = vpop.permute.xlu0 %531
        %533 = vset.pattern.permute.xlu0 0
        %534 = vperm.xlu0 %533, %v311
        %v535 = vpop.permute.xlu0 %534
        %536 = vset.pattern.permute.xlu0 0
        %537 = vperm.xlu0 %536, %v312
        %v538 = vpop.permute.xlu0 %537
        %539 = vset.pattern.permute.xlu0 0
        %540 = vperm.xlu0 %539, %v313
        %v541 = vpop.permute.xlu0 %540
        %542 = vset.pattern.permute.xlu0 0
        %543 = vperm.xlu0 %542, %v314
        %v544 = vpop.permute.xlu0 %543
        %545 = vset.pattern.permute.xlu0 0
        %546 = vperm.xlu0 %545, %v315
        %v547 = vpop.permute.xlu0 %546
        %548 = vset.pattern.permute.xlu0 0
        %549 = vperm.xlu0 %548, %v316
        %v550 = vpop.permute.xlu0 %549
        %551 = vset.pattern.permute.xlu0 0
        %552 = vperm.xlu0 %551, %v317
        %v553 = vpop.permute.xlu0 %552
        %554 = vset.pattern.permute.xlu0 0
        %555 = vperm.xlu0 %554, %v318
        %v556 = vpop.permute.xlu0 %555
        %557 = vset.pattern.permute.xlu0 0
        %558 = vperm.xlu0 %557, %v319
        %v559 = vpop.permute.xlu0 %558
        %560 = vset.pattern.permute.xlu0 0
        %561 = vperm.xlu0 %560, %v320
        %v562 = vpop.permute.xlu0 %561
        %563 = vset.pattern.permute.xlu0 0
        %564 = vperm.xlu0 %563, %v321
        %v565 = vpop.permute.xlu0 %564
        %566 = vset.pattern.permute.xlu0 0
        %567 = vperm.xlu0 %566, %v322
        %v568 = vpop.permute.xlu0 %567
        %569 = vset.pattern.permute.xlu0 0
        %570 = vperm.xlu0 %569, %v323
        %v571 = vpop.permute.xlu0 %570
        %572 = vset.pattern.permute.xlu0 0
        %573 = vperm.xlu0 %572, %v324
        %v574 = vpop.permute.xlu0 %573
        %575 = vset.pattern.permute.xlu0 0
        %576 = vperm.xlu0 %575, %v325
        %v577 = vpop.permute.xlu0 %576
        %578 = vset.pattern.permute.xlu0 0
        %579 = vperm.xlu0 %578, %v326
        %v580 = vpop.permute.xlu0 %579
        %581 = vset.pattern.permute.xlu0 0
        %582 = vperm.xlu0 %581, %v327
        %v583 = vpop.permute.xlu0 %582
        %584 = vset.pattern.permute.xlu0 0
        %585 = vperm.xlu0 %584, %v328
        %v586 = vpop.permute.xlu0 %585
        %587 = vset.pattern.permute.xlu0 0
        %588 = vperm.xlu0 %587, %v329
        %v589 = vpop.permute.xlu0 %588
        %590 = vset.pattern.permute.xlu0 0
        %591 = vperm.xlu0 %590, %v330
        %v592 = vpop.permute.xlu0 %591
        %593 = vset.pattern.permute.xlu0 0
        %594 = vperm.xlu0 %593, %v331
        %v595 = vpop.permute.xlu0 %594
        %596 = vset.pattern.permute.xlu0 0
        %597 = vperm.xlu0 %596, %v332
        %v598 = vpop.permute.xlu0 %597
        %599 = vset.pattern.permute.xlu0 0
        %600 = vperm.xlu0 %599, %v333
        %v601 = vpop.permute.xlu0 %600
        %602 = vset.pattern.permute.xlu0 0
        %603 = vperm.xlu0 %602, %v334
        %v604 = vpop.permute.xlu0 %603
        %605 = vset.pattern.permute.xlu0 0
        %606 = vperm.xlu0 %605, %v335
        %v607 = vpop.permute.xlu0 %606
        %608 = vset.pattern.permute.xlu0 0
        %609 = vperm.xlu0 %608, %v336
        %v610 = vpop.permute.xlu0 %609
        %611 = vset.pattern.permute.xlu0 0
        %612 = vperm.xlu0 %611, %v337
        %v613 = vpop.permute.xlu0 %612
        %614 = vset.pattern.permute.xlu0 0
        %615 = vperm.xlu0 %614, %v338
        %v616 = vpop.permute.xlu0 %615
        %617 = vset.pattern.permute.xlu0 0
        %618 = vperm.xlu0 %617, %v339
        %v619 = vpop.permute.xlu0 %618
        %620 = vset.pattern.permute.xlu0 0
        %621 = vperm.xlu0 %620, %v340
        %v622 = vpop.permute.xlu0 %621
        %623 = vset.pattern.permute.xlu0 0
        %624 = vperm.xlu0 %623, %v341
        %v625 = vpop.permute.xlu0 %624
        %626 = vset.pattern.permute.xlu0 0
        %627 = vperm.xlu0 %626, %v342
        %v628 = vpop.permute.xlu0 %627
        %629 = vset.pattern.permute.xlu0 0
        %630 = vperm.xlu0 %629, %v343
        %v631 = vpop.permute.xlu0 %630
        %632 = vset.pattern.permute.xlu0 0
        %633 = vperm.xlu0 %632, %v344
        %v634 = vpop.permute.xlu0 %633
        %635 = vset.pattern.permute.xlu0 0
        %636 = vperm.xlu0 %635, %v345
        %v637 = vpop.permute.xlu0 %636
        %638 = vset.pattern.permute.xlu0 0
        %639 = vperm.xlu0 %638, %v346
        %v640 = vpop.permute.xlu0 %639
        %641 = vset.pattern.permute.xlu0 0
        %642 = vperm.xlu0 %641, %v347
        %v643 = vpop.permute.xlu0 %642
        %644 = vset.pattern.permute.xlu0 0
        %645 = vperm.xlu0 %644, %v348
        %v646 = vpop.permute.xlu0 %645
        %647 = vset.pattern.permute.xlu0 0
        %648 = vperm.xlu0 %647, %v349
        %v649 = vpop.permute.xlu0 %648
        %650 = vset.pattern.permute.xlu0 0
        %651 = vperm.xlu0 %650, %v350
        %v652 = vpop.permute.xlu0 %651
        %653 = vset.pattern.permute.xlu0 0
        %654 = vperm.xlu0 %653, %v351
        %v655 = vpop.permute.xlu0 %654
        %656 = vset.pattern.permute.xlu0 0
        %657 = vperm.xlu0 %656, %v352
        %v658 = vpop.permute.xlu0 %657
        %659 = vset.pattern.permute.xlu0 0
        %660 = vperm.xlu0 %659, %v353
        %v661 = vpop.permute.xlu0 %660
        %662 = vset.pattern.permute.xlu0 0
        %663 = vperm.xlu0 %662, %v354
        %v664 = vpop.permute.xlu0 %663
        %665 = vset.pattern.permute.xlu0 0
        %666 = vperm.xlu0 %665, %v355
        %v667 = vpop.permute.xlu0 %666
        %668 = vset.pattern.permute.xlu0 0
        %669 = vperm.xlu0 %668, %v356
        %v670 = vpop.permute.xlu0 %669
        %671 = vset.pattern.permute.xlu0 0
        %672 = vperm.xlu0 %671, %v357
        %v673 = vpop.permute.xlu0 %672
        %674 = vset.pattern.permute.xlu0 0
        %675 = vperm.xlu0 %674, %v358
        %v676 = vpop.permute.xlu0 %675
        %677 = vset.pattern.permute.xlu0 0
        %678 = vperm.xlu0 %677, %v359
        %v679 = vpop.permute.xlu0 %678
        %680 = vset.pattern.permute.xlu0 0
        %681 = vperm.xlu0 %680, %v360
        %v682 = vpop.permute.xlu0 %681
        %vm683 = vcmp.eq.s32.totalorder %v490, %v493
        %vm684 = vcmp.eq.s32.totalorder %v490, %v496
        %vm685 = vcmp.eq.s32.totalorder %v490, %v499
        %vm686 = vcmp.eq.s32.totalorder %v490, %v502
        %vm687 = vcmp.eq.s32.totalorder %v490, %v505
        %vm688 = vcmp.eq.s32.totalorder %v490, %v508
        %vm689 = vcmp.eq.s32.totalorder %v490, %v511
        %vm690 = vcmp.eq.s32.totalorder %v490, %v514
        %vm691 = vcmp.eq.s32.totalorder %v490, %v517
        %vm692 = vcmp.eq.s32.totalorder %v490, %v520
        %vm693 = vcmp.eq.s32.totalorder %v490, %v523
        %vm694 = vcmp.eq.s32.totalorder %v490, %v526
        %vm695 = vcmp.eq.s32.totalorder %v490, %v529
        %vm696 = vcmp.eq.s32.totalorder %v490, %v532
        %vm697 = vcmp.eq.s32.totalorder %v490, %v535
        %vm698 = vcmp.eq.s32.totalorder %v490, %v538
        %vm699 = vcmp.eq.s32.totalorder %v490, %v541
        %vm700 = vcmp.eq.s32.totalorder %v490, %v544
        %vm701 = vcmp.eq.s32.totalorder %v490, %v547
        %vm702 = vcmp.eq.s32.totalorder %v490, %v550
        %vm703 = vcmp.eq.s32.totalorder %v490, %v553
        %vm704 = vcmp.eq.s32.totalorder %v490, %v556
        %vm705 = vcmp.eq.s32.totalorder %v490, %v559
        %vm706 = vcmp.eq.s32.totalorder %v490, %v562
        %vm707 = vcmp.eq.s32.totalorder %v490, %v565
        %vm708 = vcmp.eq.s32.totalorder %v490, %v568
        %vm709 = vcmp.eq.s32.totalorder %v490, %v571
        %vm710 = vcmp.eq.s32.totalorder %v490, %v574
        %vm711 = vcmp.eq.s32.totalorder %v490, %v577
        %vm712 = vcmp.eq.s32.totalorder %v490, %v580
        %vm713 = vcmp.eq.s32.totalorder %v490, %v583
        %vm714 = vcmp.eq.s32.totalorder %v490, %v586
        %vm715 = vcmp.eq.s32.totalorder %v490, %v589
        %vm716 = vcmp.eq.s32.totalorder %v490, %v592
        %vm717 = vcmp.eq.s32.totalorder %v490, %v595
        %vm718 = vcmp.eq.s32.totalorder %v490, %v598
        %vm719 = vcmp.eq.s32.totalorder %v490, %v601
        %vm720 = vcmp.eq.s32.totalorder %v490, %v604
        %vm721 = vcmp.eq.s32.totalorder %v490, %v607
        %vm722 = vcmp.eq.s32.totalorder %v490, %v610
        %vm723 = vcmp.eq.s32.totalorder %v490, %v613
        %vm724 = vcmp.eq.s32.totalorder %v490, %v616
        %vm725 = vcmp.eq.s32.totalorder %v490, %v619
        %vm726 = vcmp.eq.s32.totalorder %v490, %v622
        %vm727 = vcmp.eq.s32.totalorder %v490, %v625
        %vm728 = vcmp.eq.s32.totalorder %v490, %v628
        %vm729 = vcmp.eq.s32.totalorder %v490, %v631
        %vm730 = vcmp.eq.s32.totalorder %v490, %v634
        %vm731 = vcmp.eq.s32.totalorder %v490, %v637
        %vm732 = vcmp.eq.s32.totalorder %v490, %v640
        %vm733 = vcmp.eq.s32.totalorder %v490, %v643
        %vm734 = vcmp.eq.s32.totalorder %v490, %v646
        %vm735 = vcmp.eq.s32.totalorder %v490, %v649
        %vm736 = vcmp.eq.s32.totalorder %v490, %v652
        %vm737 = vcmp.eq.s32.totalorder %v490, %v655
        %vm738 = vcmp.eq.s32.totalorder %v490, %v658
        %vm739 = vcmp.eq.s32.totalorder %v490, %v661
        %vm740 = vcmp.eq.s32.totalorder %v490, %v664
        %vm741 = vcmp.eq.s32.totalorder %v490, %v667
        %vm742 = vcmp.eq.s32.totalorder %v490, %v670
        %vm743 = vcmp.eq.s32.totalorder %v490, %v673
        %vm744 = vcmp.eq.s32.totalorder %v490, %v676
        %vm745 = vcmp.eq.s32.totalorder %v490, %v679
        %vm746 = vcmp.eq.s32.totalorder %v490, %v682
        %747 = vset.pattern.permute.xlu0 0
        %748 = vperm.xlu0 %747, %v425
        %v749 = vpop.permute.xlu0 %748
        %750 = vset.pattern.permute.xlu0 0
        %751 = vperm.xlu0 %750, %v426
        %v752 = vpop.permute.xlu0 %751
        %753 = vset.pattern.permute.xlu0 0
        %754 = vperm.xlu0 %753, %v427
        %v755 = vpop.permute.xlu0 %754
        %756 = vset.pattern.permute.xlu0 0
        %757 = vperm.xlu0 %756, %v428
        %v758 = vpop.permute.xlu0 %757
        %759 = vset.pattern.permute.xlu0 0
        %760 = vperm.xlu0 %759, %v429
        %v761 = vpop.permute.xlu0 %760
        %762 = vset.pattern.permute.xlu0 0
        %763 = vperm.xlu0 %762, %v430
        %v764 = vpop.permute.xlu0 %763
        %765 = vset.pattern.permute.xlu0 0
        %766 = vperm.xlu0 %765, %v431
        %v767 = vpop.permute.xlu0 %766
        %768 = vset.pattern.permute.xlu0 0
        %769 = vperm.xlu0 %768, %v432
        %v770 = vpop.permute.xlu0 %769
        %771 = vset.pattern.permute.xlu0 0
        %772 = vperm.xlu0 %771, %v433
        %v773 = vpop.permute.xlu0 %772
        %774 = vset.pattern.permute.xlu0 0
        %775 = vperm.xlu0 %774, %v434
        %v776 = vpop.permute.xlu0 %775
        %777 = vset.pattern.permute.xlu0 0
        %778 = vperm.xlu0 %777, %v435
        %v779 = vpop.permute.xlu0 %778
        %780 = vset.pattern.permute.xlu0 0
        %781 = vperm.xlu0 %780, %v436
        %v782 = vpop.permute.xlu0 %781
        %783 = vset.pattern.permute.xlu0 0
        %784 = vperm.xlu0 %783, %v437
        %v785 = vpop.permute.xlu0 %784
        %786 = vset.pattern.permute.xlu0 0
        %787 = vperm.xlu0 %786, %v438
        %v788 = vpop.permute.xlu0 %787
        %789 = vset.pattern.permute.xlu0 0
        %790 = vperm.xlu0 %789, %v439
        %v791 = vpop.permute.xlu0 %790
        %792 = vset.pattern.permute.xlu0 0
        %793 = vperm.xlu0 %792, %v440
        %v794 = vpop.permute.xlu0 %793
        %795 = vset.pattern.permute.xlu0 0
        %796 = vperm.xlu0 %795, %v441
        %v797 = vpop.permute.xlu0 %796
        %798 = vset.pattern.permute.xlu0 0
        %799 = vperm.xlu0 %798, %v442
        %v800 = vpop.permute.xlu0 %799
        %801 = vset.pattern.permute.xlu0 0
        %802 = vperm.xlu0 %801, %v443
        %v803 = vpop.permute.xlu0 %802
        %804 = vset.pattern.permute.xlu0 0
        %805 = vperm.xlu0 %804, %v444
        %v806 = vpop.permute.xlu0 %805
        %807 = vset.pattern.permute.xlu0 0
        %808 = vperm.xlu0 %807, %v445
        %v809 = vpop.permute.xlu0 %808
        %810 = vset.pattern.permute.xlu0 0
        %811 = vperm.xlu0 %810, %v446
        %v812 = vpop.permute.xlu0 %811
        %813 = vset.pattern.permute.xlu0 0
        %814 = vperm.xlu0 %813, %v447
        %v815 = vpop.permute.xlu0 %814
        %816 = vset.pattern.permute.xlu0 0
        %817 = vperm.xlu0 %816, %v448
        %v818 = vpop.permute.xlu0 %817
        %819 = vset.pattern.permute.xlu0 0
        %820 = vperm.xlu0 %819, %v449
        %v821 = vpop.permute.xlu0 %820
        %822 = vset.pattern.permute.xlu0 0
        %823 = vperm.xlu0 %822, %v450
        %v824 = vpop.permute.xlu0 %823
        %825 = vset.pattern.permute.xlu0 0
        %826 = vperm.xlu0 %825, %v451
        %v827 = vpop.permute.xlu0 %826
        %828 = vset.pattern.permute.xlu0 0
        %829 = vperm.xlu0 %828, %v452
        %v830 = vpop.permute.xlu0 %829
        %831 = vset.pattern.permute.xlu0 0
        %832 = vperm.xlu0 %831, %v453
        %v833 = vpop.permute.xlu0 %832
        %834 = vset.pattern.permute.xlu0 0
        %835 = vperm.xlu0 %834, %v454
        %v836 = vpop.permute.xlu0 %835
        %837 = vset.pattern.permute.xlu0 0
        %838 = vperm.xlu0 %837, %v455
        %v839 = vpop.permute.xlu0 %838
        %840 = vset.pattern.permute.xlu0 0
        %841 = vperm.xlu0 %840, %v456
        %v842 = vpop.permute.xlu0 %841
        %843 = vset.pattern.permute.xlu0 0
        %844 = vperm.xlu0 %843, %v457
        %v845 = vpop.permute.xlu0 %844
        %846 = vset.pattern.permute.xlu0 0
        %847 = vperm.xlu0 %846, %v458
        %v848 = vpop.permute.xlu0 %847
        %849 = vset.pattern.permute.xlu0 0
        %850 = vperm.xlu0 %849, %v459
        %v851 = vpop.permute.xlu0 %850
        %852 = vset.pattern.permute.xlu0 0
        %853 = vperm.xlu0 %852, %v460
        %v854 = vpop.permute.xlu0 %853
        %855 = vset.pattern.permute.xlu0 0
        %856 = vperm.xlu0 %855, %v461
        %v857 = vpop.permute.xlu0 %856
        %858 = vset.pattern.permute.xlu0 0
        %859 = vperm.xlu0 %858, %v462
        %v860 = vpop.permute.xlu0 %859
        %861 = vset.pattern.permute.xlu0 0
        %862 = vperm.xlu0 %861, %v463
        %v863 = vpop.permute.xlu0 %862
        %864 = vset.pattern.permute.xlu0 0
        %865 = vperm.xlu0 %864, %v464
        %v866 = vpop.permute.xlu0 %865
        %867 = vset.pattern.permute.xlu0 0
        %868 = vperm.xlu0 %867, %v465
        %v869 = vpop.permute.xlu0 %868
        %870 = vset.pattern.permute.xlu0 0
        %871 = vperm.xlu0 %870, %v466
        %v872 = vpop.permute.xlu0 %871
        %873 = vset.pattern.permute.xlu0 0
        %874 = vperm.xlu0 %873, %v467
        %v875 = vpop.permute.xlu0 %874
        %876 = vset.pattern.permute.xlu0 0
        %877 = vperm.xlu0 %876, %v468
        %v878 = vpop.permute.xlu0 %877
        %879 = vset.pattern.permute.xlu0 0
        %880 = vperm.xlu0 %879, %v469
        %v881 = vpop.permute.xlu0 %880
        %882 = vset.pattern.permute.xlu0 0
        %883 = vperm.xlu0 %882, %v470
        %v884 = vpop.permute.xlu0 %883
        %885 = vset.pattern.permute.xlu0 0
        %886 = vperm.xlu0 %885, %v471
        %v887 = vpop.permute.xlu0 %886
        %888 = vset.pattern.permute.xlu0 0
        %889 = vperm.xlu0 %888, %v472
        %v890 = vpop.permute.xlu0 %889
        %891 = vset.pattern.permute.xlu0 0
        %892 = vperm.xlu0 %891, %v473
        %v893 = vpop.permute.xlu0 %892
        %894 = vset.pattern.permute.xlu0 0
        %895 = vperm.xlu0 %894, %v474
        %v896 = vpop.permute.xlu0 %895
        %897 = vset.pattern.permute.xlu0 0
        %898 = vperm.xlu0 %897, %v475
        %v899 = vpop.permute.xlu0 %898
        %900 = vset.pattern.permute.xlu0 0
        %901 = vperm.xlu0 %900, %v476
        %v902 = vpop.permute.xlu0 %901
        %903 = vset.pattern.permute.xlu0 0
        %904 = vperm.xlu0 %903, %v477
        %v905 = vpop.permute.xlu0 %904
        %906 = vset.pattern.permute.xlu0 0
        %907 = vperm.xlu0 %906, %v478
        %v908 = vpop.permute.xlu0 %907
        %909 = vset.pattern.permute.xlu0 0
        %910 = vperm.xlu0 %909, %v479
        %v911 = vpop.permute.xlu0 %910
        %912 = vset.pattern.permute.xlu0 0
        %913 = vperm.xlu0 %912, %v480
        %v914 = vpop.permute.xlu0 %913
        %915 = vset.pattern.permute.xlu0 0
        %916 = vperm.xlu0 %915, %v481
        %v917 = vpop.permute.xlu0 %916
        %918 = vset.pattern.permute.xlu0 0
        %919 = vperm.xlu0 %918, %v482
        %v920 = vpop.permute.xlu0 %919
        %921 = vset.pattern.permute.xlu0 0
        %922 = vperm.xlu0 %921, %v483
        %v923 = vpop.permute.xlu0 %922
        %924 = vset.pattern.permute.xlu0 0
        %925 = vperm.xlu0 %924, %v484
        %v926 = vpop.permute.xlu0 %925
        %927 = vset.pattern.permute.xlu0 0
        %928 = vperm.xlu0 %927, %v485
        %v929 = vpop.permute.xlu0 %928
        %930 = vset.pattern.permute.xlu0 0
        %931 = vperm.xlu0 %930, %v486
        %v932 = vpop.permute.xlu0 %931
        %933 = vset.pattern.permute.xlu0 0
        %934 = vperm.xlu0 %933, %v487
        %v935 = vpop.permute.xlu0 %934
        %936 = vset.pattern.permute.xlu0 0
        %937 = vperm.xlu0 %936, %v488
        %v938 = vpop.permute.xlu0 %937
        %vm939 = vcmp.eq.s32.totalorder %v490, %v749
        %vm940 = vcmp.eq.s32.totalorder %v490, %v752
        %vm941 = vcmp.eq.s32.totalorder %v490, %v755
        %vm942 = vcmp.eq.s32.totalorder %v490, %v758
        %vm943 = vcmp.eq.s32.totalorder %v490, %v761
        %vm944 = vcmp.eq.s32.totalorder %v490, %v764
        %vm945 = vcmp.eq.s32.totalorder %v490, %v767
        %vm946 = vcmp.eq.s32.totalorder %v490, %v770
        %vm947 = vcmp.eq.s32.totalorder %v490, %v773
        %vm948 = vcmp.eq.s32.totalorder %v490, %v776
        %vm949 = vcmp.eq.s32.totalorder %v490, %v779
        %vm950 = vcmp.eq.s32.totalorder %v490, %v782
        %vm951 = vcmp.eq.s32.totalorder %v490, %v785
        %vm952 = vcmp.eq.s32.totalorder %v490, %v788
        %vm953 = vcmp.eq.s32.totalorder %v490, %v791
        %vm954 = vcmp.eq.s32.totalorder %v490, %v794
        %vm955 = vcmp.eq.s32.totalorder %v490, %v797
        %vm956 = vcmp.eq.s32.totalorder %v490, %v800
        %vm957 = vcmp.eq.s32.totalorder %v490, %v803
        %vm958 = vcmp.eq.s32.totalorder %v490, %v806
        %vm959 = vcmp.eq.s32.totalorder %v490, %v809
        %vm960 = vcmp.eq.s32.totalorder %v490, %v812
        %vm961 = vcmp.eq.s32.totalorder %v490, %v815
        %vm962 = vcmp.eq.s32.totalorder %v490, %v818
        %vm963 = vcmp.eq.s32.totalorder %v490, %v821
        %vm964 = vcmp.eq.s32.totalorder %v490, %v824
        %vm965 = vcmp.eq.s32.totalorder %v490, %v827
        %vm966 = vcmp.eq.s32.totalorder %v490, %v830
        %vm967 = vcmp.eq.s32.totalorder %v490, %v833
        %vm968 = vcmp.eq.s32.totalorder %v490, %v836
        %vm969 = vcmp.eq.s32.totalorder %v490, %v839
        %vm970 = vcmp.eq.s32.totalorder %v490, %v842
        %vm971 = vcmp.eq.s32.totalorder %v490, %v845
        %vm972 = vcmp.eq.s32.totalorder %v490, %v848
        %vm973 = vcmp.eq.s32.totalorder %v490, %v851
        %vm974 = vcmp.eq.s32.totalorder %v490, %v854
        %vm975 = vcmp.eq.s32.totalorder %v490, %v857
        %vm976 = vcmp.eq.s32.totalorder %v490, %v860
        %vm977 = vcmp.eq.s32.totalorder %v490, %v863
        %vm978 = vcmp.eq.s32.totalorder %v490, %v866
        %vm979 = vcmp.eq.s32.totalorder %v490, %v869
        %vm980 = vcmp.eq.s32.totalorder %v490, %v872
        %vm981 = vcmp.eq.s32.totalorder %v490, %v875
        %vm982 = vcmp.eq.s32.totalorder %v490, %v878
        %vm983 = vcmp.eq.s32.totalorder %v490, %v881
        %vm984 = vcmp.eq.s32.totalorder %v490, %v884
        %vm985 = vcmp.eq.s32.totalorder %v490, %v887
        %vm986 = vcmp.eq.s32.totalorder %v490, %v890
        %vm987 = vcmp.eq.s32.totalorder %v490, %v893
        %vm988 = vcmp.eq.s32.totalorder %v490, %v896
        %vm989 = vcmp.eq.s32.totalorder %v490, %v899
        %vm990 = vcmp.eq.s32.totalorder %v490, %v902
        %vm991 = vcmp.eq.s32.totalorder %v490, %v905
        %vm992 = vcmp.eq.s32.totalorder %v490, %v908
        %vm993 = vcmp.eq.s32.totalorder %v490, %v911
        %vm994 = vcmp.eq.s32.totalorder %v490, %v914
        %vm995 = vcmp.eq.s32.totalorder %v490, %v917
        %vm996 = vcmp.eq.s32.totalorder %v490, %v920
        %vm997 = vcmp.eq.s32.totalorder %v490, %v923
        %vm998 = vcmp.eq.s32.totalorder %v490, %v926
        %vm999 = vcmp.eq.s32.totalorder %v490, %v929
        %vm1000 = vcmp.eq.s32.totalorder %v490, %v932
        %vm1001 = vcmp.eq.s32.totalorder %v490, %v935
        %vm1002 = vcmp.eq.s32.totalorder %v490, %v938
        %vm1003 = vmor %vm683, %vm939
        %vm1004 = vmor %vm684, %vm940
        %vm1005 = vmor %vm685, %vm941
        %vm1006 = vmor %vm686, %vm942
        %vm1007 = vmor %vm687, %vm943
        %vm1008 = vmor %vm688, %vm944
        %vm1009 = vmor %vm689, %vm945
        %vm1010 = vmor %vm690, %vm946
        %vm1011 = vmor %vm691, %vm947
        %vm1012 = vmor %vm692, %vm948
        %vm1013 = vmor %vm693, %vm949
        %vm1014 = vmor %vm694, %vm950
        %vm1015 = vmor %vm695, %vm951
        %vm1016 = vmor %vm696, %vm952
        %vm1017 = vmor %vm697, %vm953
        %vm1018 = vmor %vm698, %vm954
        %vm1019 = vmor %vm699, %vm955
        %vm1020 = vmor %vm700, %vm956
        %vm1021 = vmor %vm701, %vm957
        %vm1022 = vmor %vm702, %vm958
        %vm1023 = vmor %vm703, %vm959
        %vm1024 = vmor %vm704, %vm960
        %vm1025 = vmor %vm705, %vm961
        %vm1026 = vmor %vm706, %vm962
        %vm1027 = vmor %vm707, %vm963
        %vm1028 = vmor %vm708, %vm964
        %vm1029 = vmor %vm709, %vm965
        %vm1030 = vmor %vm710, %vm966
        %vm1031 = vmor %vm711, %vm967
        %vm1032 = vmor %vm712, %vm968
        %vm1033 = vmor %vm713, %vm969
        %vm1034 = vmor %vm714, %vm970
        %vm1035 = vmor %vm715, %vm971
        %vm1036 = vmor %vm716, %vm972
        %vm1037 = vmor %vm717, %vm973
        %vm1038 = vmor %vm718, %vm974
        %vm1039 = vmor %vm719, %vm975
        %vm1040 = vmor %vm720, %vm976
        %vm1041 = vmor %vm721, %vm977
        %vm1042 = vmor %vm722, %vm978
        %vm1043 = vmor %vm723, %vm979
        %vm1044 = vmor %vm724, %vm980
        %vm1045 = vmor %vm725, %vm981
        %vm1046 = vmor %vm726, %vm982
        %vm1047 = vmor %vm727, %vm983
        %vm1048 = vmor %vm728, %vm984
        %vm1049 = vmor %vm729, %vm985
        %vm1050 = vmor %vm730, %vm986
        %vm1051 = vmor %vm731, %vm987
        %vm1052 = vmor %vm732, %vm988
        %vm1053 = vmor %vm733, %vm989
        %vm1054 = vmor %vm734, %vm990
        %vm1055 = vmor %vm735, %vm991
        %vm1056 = vmor %vm736, %vm992
        %vm1057 = vmor %vm737, %vm993
        %vm1058 = vmor %vm738, %vm994
        %vm1059 = vmor %vm739, %vm995
        %vm1060 = vmor %vm740, %vm996
        %vm1061 = vmor %vm741, %vm997
        %vm1062 = vmor %vm742, %vm998
        %vm1063 = vmor %vm743, %vm999
        %vm1064 = vmor %vm744, %vm1000
        %vm1065 = vmor %vm745, %vm1001
        %vm1066 = vmor %vm746, %vm1002
        %v1067 = vsel %vm1003, 1, 0
        %v1068 = vsel %vm1004, 1, 0
        %v1069 = vsel %vm1005, 1, 0
        %v1070 = vsel %vm1006, 1, 0
        %v1071 = vsel %vm1007, 1, 0
        %v1072 = vsel %vm1008, 1, 0
        %v1073 = vsel %vm1009, 1, 0
        %v1074 = vsel %vm1010, 1, 0
        %v1075 = vsel %vm1011, 1, 0
        %v1076 = vsel %vm1012, 1, 0
        %v1077 = vsel %vm1013, 1, 0
        %v1078 = vsel %vm1014, 1, 0
        %v1079 = vsel %vm1015, 1, 0
        %v1080 = vsel %vm1016, 1, 0
        %v1081 = vsel %vm1017, 1, 0
        %v1082 = vsel %vm1018, 1, 0
        %v1083 = vsel %vm1019, 1, 0
        %v1084 = vsel %vm1020, 1, 0
        %v1085 = vsel %vm1021, 1, 0
        %v1086 = vsel %vm1022, 1, 0
        %v1087 = vsel %vm1023, 1, 0
        %v1088 = vsel %vm1024, 1, 0
        %v1089 = vsel %vm1025, 1, 0
        %v1090 = vsel %vm1026, 1, 0
        %v1091 = vsel %vm1027, 1, 0
        %v1092 = vsel %vm1028, 1, 0
        %v1093 = vsel %vm1029, 1, 0
        %v1094 = vsel %vm1030, 1, 0
        %v1095 = vsel %vm1031, 1, 0
        %v1096 = vsel %vm1032, 1, 0
        %v1097 = vsel %vm1033, 1, 0
        %v1098 = vsel %vm1034, 1, 0
        %v1099 = vsel %vm1035, 1, 0
        %v1100 = vsel %vm1036, 1, 0
        %v1101 = vsel %vm1037, 1, 0
        %v1102 = vsel %vm1038, 1, 0
        %v1103 = vsel %vm1039, 1, 0
        %v1104 = vsel %vm1040, 1, 0
        %v1105 = vsel %vm1041, 1, 0
        %v1106 = vsel %vm1042, 1, 0
        %v1107 = vsel %vm1043, 1, 0
        %v1108 = vsel %vm1044, 1, 0
        %v1109 = vsel %vm1045, 1, 0
        %v1110 = vsel %vm1046, 1, 0
        %v1111 = vsel %vm1047, 1, 0
        %v1112 = vsel %vm1048, 1, 0
        %v1113 = vsel %vm1049, 1, 0
        %v1114 = vsel %vm1050, 1, 0
        %v1115 = vsel %vm1051, 1, 0
        %v1116 = vsel %vm1052, 1, 0
        %v1117 = vsel %vm1053, 1, 0
        %v1118 = vsel %vm1054, 1, 0
        %v1119 = vsel %vm1055, 1, 0
        %v1120 = vsel %vm1056, 1, 0
        %v1121 = vsel %vm1057, 1, 0
        %v1122 = vsel %vm1058, 1, 0
        %v1123 = vsel %vm1059, 1, 0
        %v1124 = vsel %vm1060, 1, 0
        %v1125 = vsel %vm1061, 1, 0
        %v1126 = vsel %vm1062, 1, 0
        %v1127 = vsel %vm1063, 1, 0
        %v1128 = vsel %vm1064, 1, 0
        %v1129 = vsel %vm1065, 1, 0
        %v1130 = vsel %vm1066, 1, 0
        %v1131 = vcvt.s32.f32 %v1067
        %v1132 = vcvt.s32.f32 %v1068
        %v1133 = vcvt.s32.f32 %v1069
        %v1134 = vcvt.s32.f32 %v1070
        %v1135 = vcvt.s32.f32 %v1071
        %v1136 = vcvt.s32.f32 %v1072
        %v1137 = vcvt.s32.f32 %v1073
        %v1138 = vcvt.s32.f32 %v1074
        %v1139 = vcvt.s32.f32 %v1075
        %v1140 = vcvt.s32.f32 %v1076
        %v1141 = vcvt.s32.f32 %v1077
        %v1142 = vcvt.s32.f32 %v1078
        %v1143 = vcvt.s32.f32 %v1079
        %v1144 = vcvt.s32.f32 %v1080
        %v1145 = vcvt.s32.f32 %v1081
        %v1146 = vcvt.s32.f32 %v1082
        %v1147 = vcvt.s32.f32 %v1083
        %v1148 = vcvt.s32.f32 %v1084
        %v1149 = vcvt.s32.f32 %v1085
        %v1150 = vcvt.s32.f32 %v1086
        %v1151 = vcvt.s32.f32 %v1087
        %v1152 = vcvt.s32.f32 %v1088
        %v1153 = vcvt.s32.f32 %v1089
        %v1154 = vcvt.s32.f32 %v1090
        %v1155 = vcvt.s32.f32 %v1091
        %v1156 = vcvt.s32.f32 %v1092
        %v1157 = vcvt.s32.f32 %v1093
        %v1158 = vcvt.s32.f32 %v1094
        %v1159 = vcvt.s32.f32 %v1095
        %v1160 = vcvt.s32.f32 %v1096
        %v1161 = vcvt.s32.f32 %v1097
        %v1162 = vcvt.s32.f32 %v1098
        %v1163 = vcvt.s32.f32 %v1099
        %v1164 = vcvt.s32.f32 %v1100
        %v1165 = vcvt.s32.f32 %v1101
        %v1166 = vcvt.s32.f32 %v1102
        %v1167 = vcvt.s32.f32 %v1103
        %v1168 = vcvt.s32.f32 %v1104
        %v1169 = vcvt.s32.f32 %v1105
        %v1170 = vcvt.s32.f32 %v1106
        %v1171 = vcvt.s32.f32 %v1107
        %v1172 = vcvt.s32.f32 %v1108
        %v1173 = vcvt.s32.f32 %v1109
        %v1174 = vcvt.s32.f32 %v1110
        %v1175 = vcvt.s32.f32 %v1111
        %v1176 = vcvt.s32.f32 %v1112
        %v1177 = vcvt.s32.f32 %v1113
        %v1178 = vcvt.s32.f32 %v1114
        %v1179 = vcvt.s32.f32 %v1115
        %v1180 = vcvt.s32.f32 %v1116
        %v1181 = vcvt.s32.f32 %v1117
        %v1182 = vcvt.s32.f32 %v1118
        %v1183 = vcvt.s32.f32 %v1119
        %v1184 = vcvt.s32.f32 %v1120
        %v1185 = vcvt.s32.f32 %v1121
        %v1186 = vcvt.s32.f32 %v1122
        %v1187 = vcvt.s32.f32 %v1123
        %v1188 = vcvt.s32.f32 %v1124
        %v1189 = vcvt.s32.f32 %v1125
        %v1190 = vcvt.s32.f32 %v1126
        %v1191 = vcvt.s32.f32 %v1127
        %v1192 = vcvt.s32.f32 %v1128
        %v1193 = vcvt.s32.f32 %v1129
        %v1194 = vcvt.s32.f32 %v1130
        %v1195 = vpack.c.bf16 %v1132, %v1131
        %v1196 = vpack.c.bf16 %v1134, %v1133
        %v1197 = vpack.c.bf16 %v1136, %v1135
        %v1198 = vpack.c.bf16 %v1138, %v1137
        %v1199 = vpack.c.bf16 %v1140, %v1139
        %v1200 = vpack.c.bf16 %v1142, %v1141
        %v1201 = vpack.c.bf16 %v1144, %v1143
        %v1202 = vpack.c.bf16 %v1146, %v1145
        %v1203 = vpack.c.bf16 %v1148, %v1147
        %v1204 = vpack.c.bf16 %v1150, %v1149
        %v1205 = vpack.c.bf16 %v1152, %v1151
        %v1206 = vpack.c.bf16 %v1154, %v1153
        %v1207 = vpack.c.bf16 %v1156, %v1155
        %v1208 = vpack.c.bf16 %v1158, %v1157
        %v1209 = vpack.c.bf16 %v1160, %v1159
        %v1210 = vpack.c.bf16 %v1162, %v1161
        %v1211 = vpack.c.bf16 %v1164, %v1163
        %v1212 = vpack.c.bf16 %v1166, %v1165
        %v1213 = vpack.c.bf16 %v1168, %v1167
        %v1214 = vpack.c.bf16 %v1170, %v1169
        %v1215 = vpack.c.bf16 %v1172, %v1171
        %v1216 = vpack.c.bf16 %v1174, %v1173
        %v1217 = vpack.c.bf16 %v1176, %v1175
        %v1218 = vpack.c.bf16 %v1178, %v1177
        %v1219 = vpack.c.bf16 %v1180, %v1179
        %v1220 = vpack.c.bf16 %v1182, %v1181
        %v1221 = vpack.c.bf16 %v1184, %v1183
        %v1222 = vpack.c.bf16 %v1186, %v1185
        %v1223 = vpack.c.bf16 %v1188, %v1187
        %v1224 = vpack.c.bf16 %v1190, %v1189
        %v1225 = vpack.c.bf16 %v1192, %v1191
        %v1226 = vpack.c.bf16 %v1194, %v1193
        %v1227 = vld [vmem:[%s3] sm:$0xf]
        %v1228 = vld [vmem:[%s3 + $0x4] sm:$0xf]
        %v1229 = vld [vmem:[%s3 + $0x8] sm:$0xf]
        %v1230 = vld [vmem:[%s3 + $0xc] sm:$0xf]
        %v1231 = vld [vmem:[%s3 + $0x10] sm:$0xf]
        %v1232 = vld [vmem:[%s3 + $0x14] sm:$0xf]
        %v1233 = vld [vmem:[%s3 + $0x18] sm:$0xf]
        %v1234 = vld [vmem:[%s3 + $0x1c] sm:$0xf]
        %v1235 = vld [vmem:[%s3 + $0x20] sm:$0xf]
        %v1236 = vld [vmem:[%s3 + $0x24] sm:$0xf]
        %v1237 = vld [vmem:[%s3 + $0x28] sm:$0xf]
        %v1238 = vld [vmem:[%s3 + $0x2c] sm:$0xf]
        %v1239 = vld [vmem:[%s3 + $0x30] sm:$0xf]
        %v1240 = vld [vmem:[%s3 + $0x34] sm:$0xf]
        %v1241 = vld [vmem:[%s3 + $0x38] sm:$0xf]
        %v1242 = vld [vmem:[%s3 + $0x3c] sm:$0xf]
        %v1243 = vld [vmem:[%s294] sm:$0xff]
        %v1244 = vld [vmem:[%s294 + $0x8] sm:$0xff]
        %v1245 = vld [vmem:[%s294 + $0x10] sm:$0xff]
        %v1246 = vld [vmem:[%s294 + $0x18] sm:$0xff]
        %v1247 = vld [vmem:[%s294 + $0x20] sm:$0xff]
        %v1248 = vld [vmem:[%s294 + $0x28] sm:$0xff]
        %v1249 = vld [vmem:[%s294 + $0x30] sm:$0xff]
        %v1250 = vld [vmem:[%s294 + $0x38] sm:$0xff]
        %v1251 = vld [vmem:[%s294 + $0x40] sm:$0xff]
        %v1252 = vld [vmem:[%s294 + $0x48] sm:$0xff]
        %v1253 = vld [vmem:[%s294 + $0x50] sm:$0xff]
        %v1254 = vld [vmem:[%s294 + $0x58] sm:$0xff]
        %v1255 = vld [vmem:[%s294 + $0x60] sm:$0xff]
        %v1256 = vld [vmem:[%s294 + $0x68] sm:$0xff]
        %v1257 = vld [vmem:[%s294 + $0x70] sm:$0xff]
        %v1258 = vld [vmem:[%s294 + $0x78] sm:$0xff]
        %v1259 = vld [vmem:[%s294 + $0x80] sm:$0xff]
        %v1260 = vld [vmem:[%s294 + $0x88] sm:$0xff]
        %v1261 = vld [vmem:[%s294 + $0x90] sm:$0xff]
        %v1262 = vld [vmem:[%s294 + $0x98] sm:$0xff]
        %v1263 = vld [vmem:[%s294 + $0xa0] sm:$0xff]
        %v1264 = vld [vmem:[%s294 + $0xa8] sm:$0xff]
        %v1265 = vld [vmem:[%s294 + $0xb0] sm:$0xff]
        %v1266 = vld [vmem:[%s294 + $0xb8] sm:$0xff]
        %v1267 = vld [vmem:[%s294 + $0xc0] sm:$0xff]
        %v1268 = vld [vmem:[%s294 + $0xc8] sm:$0xff]
        %v1269 = vld [vmem:[%s294 + $0xd0] sm:$0xff]
        %v1270 = vld [vmem:[%s294 + $0xd8] sm:$0xff]
        %v1271 = vld [vmem:[%s294 + $0xe0] sm:$0xff]
        %v1272 = vld [vmem:[%s294 + $0xe8] sm:$0xff]
        %v1273 = vld [vmem:[%s294 + $0xf0] sm:$0xff]
        %v1274 = vld [vmem:[%s294 + $0xf8] sm:$0xff]
        %v1275 = vld [vmem:[%s294 + $0x100] sm:$0xff]
        %v1276 = vld [vmem:[%s294 + $0x108] sm:$0xff]
        %v1277 = vld [vmem:[%s294 + $0x110] sm:$0xff]
        %v1278 = vld [vmem:[%s294 + $0x118] sm:$0xff]
        %v1279 = vld [vmem:[%s294 + $0x120] sm:$0xff]
        %v1280 = vld [vmem:[%s294 + $0x128] sm:$0xff]
        %v1281 = vld [vmem:[%s294 + $0x130] sm:$0xff]
        %v1282 = vld [vmem:[%s294 + $0x138] sm:$0xff]
        %v1283 = vld [vmem:[%s294 + $0x140] sm:$0xff]
        %v1284 = vld [vmem:[%s294 + $0x148] sm:$0xff]
        %v1285 = vld [vmem:[%s294 + $0x150] sm:$0xff]
        %v1286 = vld [vmem:[%s294 + $0x158] sm:$0xff]
        %v1287 = vld [vmem:[%s294 + $0x160] sm:$0xff]
        %v1288 = vld [vmem:[%s294 + $0x168] sm:$0xff]
        %v1289 = vld [vmem:[%s294 + $0x170] sm:$0xff]
        %v1290 = vld [vmem:[%s294 + $0x178] sm:$0xff]
        %v1291 = vld [vmem:[%s294 + $0x180] sm:$0xff]
        %v1292 = vld [vmem:[%s294 + $0x188] sm:$0xff]
        %v1293 = vld [vmem:[%s294 + $0x190] sm:$0xff]
        %v1294 = vld [vmem:[%s294 + $0x198] sm:$0xff]
        %v1295 = vld [vmem:[%s294 + $0x1a0] sm:$0xff]
        %v1296 = vld [vmem:[%s294 + $0x1a8] sm:$0xff]
        %v1297 = vld [vmem:[%s294 + $0x1b0] sm:$0xff]
        %v1298 = vld [vmem:[%s294 + $0x1b8] sm:$0xff]
        %v1299 = vld [vmem:[%s294 + $0x1c0] sm:$0xff]
        %v1300 = vld [vmem:[%s294 + $0x1c8] sm:$0xff]
        %v1301 = vld [vmem:[%s294 + $0x1d0] sm:$0xff]
        %v1302 = vld [vmem:[%s294 + $0x1d8] sm:$0xff]
        %v1303 = vld [vmem:[%s294 + $0x1e0] sm:$0xff]
        %v1304 = vld [vmem:[%s294 + $0x1e8] sm:$0xff]
        %v1305 = vld [vmem:[%s294 + $0x1f0] sm:$0xff]
        %v1306 = vld [vmem:[%s294 + $0x1f8] sm:$0xff]
        %v1307 = vld [vmem:[%s4] sm:$0x1]
        %1309 = vset.pattern.permute.xlu0 0
        %1310 = vperm.xlu0 %1309, %v1243
        %v1311 = vpop.permute.xlu0 %1310
        %1314 = vset.pattern.permute.xlu0 0
        %1315 = vperm.xlu0 %1314, %v1244
        %v1316 = vpop.permute.xlu0 %1315
        %1319 = vset.pattern.permute.xlu0 0
        %1320 = vperm.xlu0 %1319, %v1245
        %v1321 = vpop.permute.xlu0 %1320
        %1324 = vset.pattern.permute.xlu0 0
        %1325 = vperm.xlu0 %1324, %v1246
        %v1326 = vpop.permute.xlu0 %1325
        %1329 = vset.pattern.permute.xlu0 0
        %1330 = vperm.xlu0 %1329, %v1247
        %v1331 = vpop.permute.xlu0 %1330
        %1334 = vset.pattern.permute.xlu0 0
        %1335 = vperm.xlu0 %1334, %v1248
        %v1336 = vpop.permute.xlu0 %1335
        %1339 = vset.pattern.permute.xlu0 0
        %1340 = vperm.xlu0 %1339, %v1249
        %v1341 = vpop.permute.xlu0 %1340
        %1344 = vset.pattern.permute.xlu0 0
        %1345 = vperm.xlu0 %1344, %v1250
        %v1346 = vpop.permute.xlu0 %1345
        %1349 = vset.pattern.permute.xlu0 0
        %1350 = vperm.xlu0 %1349, %v1251
        %v1351 = vpop.permute.xlu0 %1350
        %1354 = vset.pattern.permute.xlu0 0
        %1355 = vperm.xlu0 %1354, %v1252
        %v1356 = vpop.permute.xlu0 %1355
        %1359 = vset.pattern.permute.xlu0 0
        %1360 = vperm.xlu0 %1359, %v1253
        %v1361 = vpop.permute.xlu0 %1360
        %1364 = vset.pattern.permute.xlu0 0
        %1365 = vperm.xlu0 %1364, %v1254
        %v1366 = vpop.permute.xlu0 %1365
        %1369 = vset.pattern.permute.xlu0 0
        %1370 = vperm.xlu0 %1369, %v1255
        %v1371 = vpop.permute.xlu0 %1370
        %1374 = vset.pattern.permute.xlu0 0
        %1375 = vperm.xlu0 %1374, %v1256
        %v1376 = vpop.permute.xlu0 %1375
        %1379 = vset.pattern.permute.xlu0 0
        %1380 = vperm.xlu0 %1379, %v1257
        %v1381 = vpop.permute.xlu0 %1380
        %1384 = vset.pattern.permute.xlu0 0
        %1385 = vperm.xlu0 %1384, %v1258
        %v1386 = vpop.permute.xlu0 %1385
        %1389 = vset.pattern.permute.xlu0 0
        %1390 = vperm.xlu0 %1389, %v1259
        %v1391 = vpop.permute.xlu0 %1390
        %1394 = vset.pattern.permute.xlu0 0
        %1395 = vperm.xlu0 %1394, %v1260
        %v1396 = vpop.permute.xlu0 %1395
        %1399 = vset.pattern.permute.xlu0 0
        %1400 = vperm.xlu0 %1399, %v1261
        %v1401 = vpop.permute.xlu0 %1400
        %1404 = vset.pattern.permute.xlu0 0
        %1405 = vperm.xlu0 %1404, %v1262
        %v1406 = vpop.permute.xlu0 %1405
        %1409 = vset.pattern.permute.xlu0 0
        %1410 = vperm.xlu0 %1409, %v1263
        %v1411 = vpop.permute.xlu0 %1410
        %1414 = vset.pattern.permute.xlu0 0
        %1415 = vperm.xlu0 %1414, %v1264
        %v1416 = vpop.permute.xlu0 %1415
        %1419 = vset.pattern.permute.xlu0 0
        %1420 = vperm.xlu0 %1419, %v1265
        %v1421 = vpop.permute.xlu0 %1420
        %1424 = vset.pattern.permute.xlu0 0
        %1425 = vperm.xlu0 %1424, %v1266
        %v1426 = vpop.permute.xlu0 %1425
        %1429 = vset.pattern.permute.xlu0 0
        %1430 = vperm.xlu0 %1429, %v1267
        %v1431 = vpop.permute.xlu0 %1430
        %1434 = vset.pattern.permute.xlu0 0
        %1435 = vperm.xlu0 %1434, %v1268
        %v1436 = vpop.permute.xlu0 %1435
        %1439 = vset.pattern.permute.xlu0 0
        %1440 = vperm.xlu0 %1439, %v1269
        %v1441 = vpop.permute.xlu0 %1440
        %1444 = vset.pattern.permute.xlu0 0
        %1445 = vperm.xlu0 %1444, %v1270
        %v1446 = vpop.permute.xlu0 %1445
        %1449 = vset.pattern.permute.xlu0 0
        %1450 = vperm.xlu0 %1449, %v1271
        %v1451 = vpop.permute.xlu0 %1450
        %1454 = vset.pattern.permute.xlu0 0
        %1455 = vperm.xlu0 %1454, %v1272
        %v1456 = vpop.permute.xlu0 %1455
        %1459 = vset.pattern.permute.xlu0 0
        %1460 = vperm.xlu0 %1459, %v1273
        %v1461 = vpop.permute.xlu0 %1460
        %1464 = vset.pattern.permute.xlu0 0
        %1465 = vperm.xlu0 %1464, %v1274
        %v1466 = vpop.permute.xlu0 %1465
        %1469 = vset.pattern.permute.xlu0 0
        %1470 = vperm.xlu0 %1469, %v1275
        %v1471 = vpop.permute.xlu0 %1470
        %1474 = vset.pattern.permute.xlu0 0
        %1475 = vperm.xlu0 %1474, %v1276
        %v1476 = vpop.permute.xlu0 %1475
        %1479 = vset.pattern.permute.xlu0 0
        %1480 = vperm.xlu0 %1479, %v1277
        %v1481 = vpop.permute.xlu0 %1480
        %1484 = vset.pattern.permute.xlu0 0
        %1485 = vperm.xlu0 %1484, %v1278
        %v1486 = vpop.permute.xlu0 %1485
        %1489 = vset.pattern.permute.xlu0 0
        %1490 = vperm.xlu0 %1489, %v1279
        %v1491 = vpop.permute.xlu0 %1490
        %1494 = vset.pattern.permute.xlu0 0
        %1495 = vperm.xlu0 %1494, %v1280
        %v1496 = vpop.permute.xlu0 %1495
        %1499 = vset.pattern.permute.xlu0 0
        %1500 = vperm.xlu0 %1499, %v1281
        %v1501 = vpop.permute.xlu0 %1500
        %1504 = vset.pattern.permute.xlu0 0
        %1505 = vperm.xlu0 %1504, %v1282
        %v1506 = vpop.permute.xlu0 %1505
        %1509 = vset.pattern.permute.xlu0 0
        %1510 = vperm.xlu0 %1509, %v1283
        %v1511 = vpop.permute.xlu0 %1510
        %1514 = vset.pattern.permute.xlu0 0
        %1515 = vperm.xlu0 %1514, %v1284
        %v1516 = vpop.permute.xlu0 %1515
        %1519 = vset.pattern.permute.xlu0 0
        %1520 = vperm.xlu0 %1519, %v1285
        %v1521 = vpop.permute.xlu0 %1520
        %1524 = vset.pattern.permute.xlu0 0
        %1525 = vperm.xlu0 %1524, %v1286
        %v1526 = vpop.permute.xlu0 %1525
        %1529 = vset.pattern.permute.xlu0 0
        %1530 = vperm.xlu0 %1529, %v1287
        %v1531 = vpop.permute.xlu0 %1530
        %1534 = vset.pattern.permute.xlu0 0
        %1535 = vperm.xlu0 %1534, %v1288
        %v1536 = vpop.permute.xlu0 %1535
        %1539 = vset.pattern.permute.xlu0 0
        %1540 = vperm.xlu0 %1539, %v1289
        %v1541 = vpop.permute.xlu0 %1540
        %1544 = vset.pattern.permute.xlu0 0
        %1545 = vperm.xlu0 %1544, %v1290
        %v1546 = vpop.permute.xlu0 %1545
        %1549 = vset.pattern.permute.xlu0 0
        %1550 = vperm.xlu0 %1549, %v1291
        %v1551 = vpop.permute.xlu0 %1550
        %1554 = vset.pattern.permute.xlu0 0
        %1555 = vperm.xlu0 %1554, %v1292
        %v1556 = vpop.permute.xlu0 %1555
        %1559 = vset.pattern.permute.xlu0 0
        %1560 = vperm.xlu0 %1559, %v1293
        %v1561 = vpop.permute.xlu0 %1560
        %1564 = vset.pattern.permute.xlu0 0
        %1565 = vperm.xlu0 %1564, %v1294
        %v1566 = vpop.permute.xlu0 %1565
        %1569 = vset.pattern.permute.xlu0 0
        %1570 = vperm.xlu0 %1569, %v1295
        %v1571 = vpop.permute.xlu0 %1570
        %1574 = vset.pattern.permute.xlu0 0
        %1575 = vperm.xlu0 %1574, %v1296
        %v1576 = vpop.permute.xlu0 %1575
        %1579 = vset.pattern.permute.xlu0 0
        %1580 = vperm.xlu0 %1579, %v1297
        %v1581 = vpop.permute.xlu0 %1580
        %1584 = vset.pattern.permute.xlu0 0
        %1585 = vperm.xlu0 %1584, %v1298
        %v1586 = vpop.permute.xlu0 %1585
        %1589 = vset.pattern.permute.xlu0 0
        %1590 = vperm.xlu0 %1589, %v1299
        %v1591 = vpop.permute.xlu0 %1590
        %1594 = vset.pattern.permute.xlu0 0
        %1595 = vperm.xlu0 %1594, %v1300
        %v1596 = vpop.permute.xlu0 %1595
        %1599 = vset.pattern.permute.xlu0 0
        %1600 = vperm.xlu0 %1599, %v1301
        %v1601 = vpop.permute.xlu0 %1600
        %1604 = vset.pattern.permute.xlu0 0
        %1605 = vperm.xlu0 %1604, %v1302
        %v1606 = vpop.permute.xlu0 %1605
        %1609 = vset.pattern.permute.xlu0 0
        %1610 = vperm.xlu0 %1609, %v1303
        %v1611 = vpop.permute.xlu0 %1610
        %1614 = vset.pattern.permute.xlu0 0
        %1615 = vperm.xlu0 %1614, %v1304
        %v1616 = vpop.permute.xlu0 %1615
        %1619 = vset.pattern.permute.xlu0 0
        %1620 = vperm.xlu0 %1619, %v1305
        %v1621 = vpop.permute.xlu0 %1620
        %1624 = vset.pattern.permute.xlu0 0
        %1625 = vperm.xlu0 %1624, %v1306
        %v1626 = vpop.permute.xlu0 %1625
        %v1629 = vperm.slane %v1307, 0
        %v1631 = vmul.f32 %v1311, %v1629
        %v1632 = vmul.f32 %v1316, %v1629
        %v1633 = vmul.f32 %v1321, %v1629
        %v1634 = vmul.f32 %v1326, %v1629
        %v1635 = vmul.f32 %v1331, %v1629
        %v1636 = vmul.f32 %v1336, %v1629
        %v1637 = vmul.f32 %v1341, %v1629
        %v1638 = vmul.f32 %v1346, %v1629
        %v1639 = vmul.f32 %v1351, %v1629
        %v1640 = vmul.f32 %v1356, %v1629
        %v1641 = vmul.f32 %v1361, %v1629
        %v1642 = vmul.f32 %v1366, %v1629
        %v1643 = vmul.f32 %v1371, %v1629
        %v1644 = vmul.f32 %v1376, %v1629
        %v1645 = vmul.f32 %v1381, %v1629
        %v1646 = vmul.f32 %v1386, %v1629
        %v1647 = vmul.f32 %v1391, %v1629
        %v1648 = vmul.f32 %v1396, %v1629
        %v1649 = vmul.f32 %v1401, %v1629
        %v1650 = vmul.f32 %v1406, %v1629
        %v1651 = vmul.f32 %v1411, %v1629
        %v1652 = vmul.f32 %v1416, %v1629
        %v1653 = vmul.f32 %v1421, %v1629
        %v1654 = vmul.f32 %v1426, %v1629
        %v1655 = vmul.f32 %v1431, %v1629
        %v1656 = vmul.f32 %v1436, %v1629
        %v1657 = vmul.f32 %v1441, %v1629
        %v1658 = vmul.f32 %v1446, %v1629
        %v1659 = vmul.f32 %v1451, %v1629
        %v1660 = vmul.f32 %v1456, %v1629
        %v1661 = vmul.f32 %v1461, %v1629
        %v1662 = vmul.f32 %v1466, %v1629
        %v1663 = vmul.f32 %v1471, %v1629
        %v1664 = vmul.f32 %v1476, %v1629
        %v1665 = vmul.f32 %v1481, %v1629
        %v1666 = vmul.f32 %v1486, %v1629
        %v1667 = vmul.f32 %v1491, %v1629
        %v1668 = vmul.f32 %v1496, %v1629
        %v1669 = vmul.f32 %v1501, %v1629
        %v1670 = vmul.f32 %v1506, %v1629
        %v1671 = vmul.f32 %v1511, %v1629
        %v1672 = vmul.f32 %v1516, %v1629
        %v1673 = vmul.f32 %v1521, %v1629
        %v1674 = vmul.f32 %v1526, %v1629
        %v1675 = vmul.f32 %v1531, %v1629
        %v1676 = vmul.f32 %v1536, %v1629
        %v1677 = vmul.f32 %v1541, %v1629
        %v1678 = vmul.f32 %v1546, %v1629
        %v1679 = vmul.f32 %v1551, %v1629
        %v1680 = vmul.f32 %v1556, %v1629
        %v1681 = vmul.f32 %v1561, %v1629
        %v1682 = vmul.f32 %v1566, %v1629
        %v1683 = vmul.f32 %v1571, %v1629
        %v1684 = vmul.f32 %v1576, %v1629
        %v1685 = vmul.f32 %v1581, %v1629
        %v1686 = vmul.f32 %v1586, %v1629
        %v1687 = vmul.f32 %v1591, %v1629
        %v1688 = vmul.f32 %v1596, %v1629
        %v1689 = vmul.f32 %v1601, %v1629
        %v1690 = vmul.f32 %v1606, %v1629
        %v1691 = vmul.f32 %v1611, %v1629
        %v1692 = vmul.f32 %v1616, %v1629
        %v1693 = vmul.f32 %v1621, %v1629
        %v1694 = vmul.f32 %v1626, %v1629
        %v1695 = vld [vmem:[%s5] sm:$0x1]
        %v1697 = vperm.slane %v1695, 0
        %v1699 = vadd.f32 %v1631, %v1697
        %v1700 = vadd.f32 %v1632, %v1697
        %v1701 = vadd.f32 %v1633, %v1697
        %v1702 = vadd.f32 %v1634, %v1697
        %v1703 = vadd.f32 %v1635, %v1697
        %v1704 = vadd.f32 %v1636, %v1697
        %v1705 = vadd.f32 %v1637, %v1697
        %v1706 = vadd.f32 %v1638, %v1697
        %v1707 = vadd.f32 %v1639, %v1697
        %v1708 = vadd.f32 %v1640, %v1697
        %v1709 = vadd.f32 %v1641, %v1697
        %v1710 = vadd.f32 %v1642, %v1697
        %v1711 = vadd.f32 %v1643, %v1697
        %v1712 = vadd.f32 %v1644, %v1697
        %v1713 = vadd.f32 %v1645, %v1697
        %v1714 = vadd.f32 %v1646, %v1697
        %v1715 = vadd.f32 %v1647, %v1697
        %v1716 = vadd.f32 %v1648, %v1697
        %v1717 = vadd.f32 %v1649, %v1697
        %v1718 = vadd.f32 %v1650, %v1697
        %v1719 = vadd.f32 %v1651, %v1697
        %v1720 = vadd.f32 %v1652, %v1697
        %v1721 = vadd.f32 %v1653, %v1697
        %v1722 = vadd.f32 %v1654, %v1697
        %v1723 = vadd.f32 %v1655, %v1697
        %v1724 = vadd.f32 %v1656, %v1697
        %v1725 = vadd.f32 %v1657, %v1697
        %v1726 = vadd.f32 %v1658, %v1697
        %v1727 = vadd.f32 %v1659, %v1697
        %v1728 = vadd.f32 %v1660, %v1697
        %v1729 = vadd.f32 %v1661, %v1697
        %v1730 = vadd.f32 %v1662, %v1697
        %v1731 = vadd.f32 %v1663, %v1697
        %v1732 = vadd.f32 %v1664, %v1697
        %v1733 = vadd.f32 %v1665, %v1697
        %v1734 = vadd.f32 %v1666, %v1697
        %v1735 = vadd.f32 %v1667, %v1697
        %v1736 = vadd.f32 %v1668, %v1697
        %v1737 = vadd.f32 %v1669, %v1697
        %v1738 = vadd.f32 %v1670, %v1697
        %v1739 = vadd.f32 %v1671, %v1697
        %v1740 = vadd.f32 %v1672, %v1697
        %v1741 = vadd.f32 %v1673, %v1697
        %v1742 = vadd.f32 %v1674, %v1697
        %v1743 = vadd.f32 %v1675, %v1697
        %v1744 = vadd.f32 %v1676, %v1697
        %v1745 = vadd.f32 %v1677, %v1697
        %v1746 = vadd.f32 %v1678, %v1697
        %v1747 = vadd.f32 %v1679, %v1697
        %v1748 = vadd.f32 %v1680, %v1697
        %v1749 = vadd.f32 %v1681, %v1697
        %v1750 = vadd.f32 %v1682, %v1697
        %v1751 = vadd.f32 %v1683, %v1697
        %v1752 = vadd.f32 %v1684, %v1697
        %v1753 = vadd.f32 %v1685, %v1697
        %v1754 = vadd.f32 %v1686, %v1697
        %v1755 = vadd.f32 %v1687, %v1697
        %v1756 = vadd.f32 %v1688, %v1697
        %v1757 = vadd.f32 %v1689, %v1697
        %v1758 = vadd.f32 %v1690, %v1697
        %v1759 = vadd.f32 %v1691, %v1697
        %v1760 = vadd.f32 %v1692, %v1697
        %v1761 = vadd.f32 %v1693, %v1697
        %v1762 = vadd.f32 %v1694, %v1697
        %v1779 = vunpack.c.l.b16 %v1227
        %v1780 = vunpack.c.l.b16 %v1228
        %v1781 = vunpack.c.l.b16 %v1229
        %v1782 = vunpack.c.l.b16 %v1230
        %v1783 = vunpack.c.l.b16 %v1231
        %v1784 = vunpack.c.l.b16 %v1232
        %v1785 = vunpack.c.l.b16 %v1233
        %v1786 = vunpack.c.l.b16 %v1234
        %v1787 = vunpack.c.l.b16 %v1235
        %v1788 = vunpack.c.l.b16 %v1236
        %v1789 = vunpack.c.l.b16 %v1237
        %v1790 = vunpack.c.l.b16 %v1238
        %v1791 = vunpack.c.l.b16 %v1239
        %v1792 = vunpack.c.l.b16 %v1240
        %v1793 = vunpack.c.l.b16 %v1241
        %v1794 = vunpack.c.l.b16 %v1242
        %v1795 = vpack.c.b16 %v1780, %v1779
        %v1796 = vpack.c.b16 %v1782, %v1781
        %v1797 = vpack.c.b16 %v1784, %v1783
        %v1798 = vpack.c.b16 %v1786, %v1785
        %v1799 = vpack.c.b16 %v1788, %v1787
        %v1800 = vpack.c.b16 %v1790, %v1789
        %v1801 = vpack.c.b16 %v1792, %v1791
        %v1802 = vpack.c.b16 %v1794, %v1793
        %1811 = vmatpush.bf16.msra.mxu0 %v1802
        %1812 = vmatpush.bf16.msra.mxu0 %v1801
        %1813 = vmatpush.bf16.msra.mxu0 %v1800
        %1814 = vmatpush.bf16.msra.mxu0 %v1799
        %1815 = vmatpush.bf16.msra.mxu0 %v1798
        %1816 = vmatpush.bf16.msra.mxu0 %v1797
        %1817 = vmatpush.bf16.msra.mxu0 %v1796
        %1818 = vmatpush.bf16.msra.mxu0 %v1795
        %1819 = vmatmul.bf16.gmra.mxu0 %v1195
        %v1820 = vpop.f32.mrf.mxu0
        %v1821 = vadd.f32 %v1699, %v1820
        %v1822 = vpop.f32.mrf.mxu0
        %v1823 = vadd.f32 %v1700, %v1822
        %1824 = vmatmul.bf16.gmra.mxu0 %v1196
        %v1825 = vpop.f32.mrf.mxu0
        %v1826 = vadd.f32 %v1701, %v1825
        %v1827 = vpop.f32.mrf.mxu0
        %v1828 = vadd.f32 %v1702, %v1827
        %1829 = vmatmul.bf16.gmra.mxu0 %v1197
        %v1830 = vpop.f32.mrf.mxu0
        %v1831 = vadd.f32 %v1703, %v1830
        %v1832 = vpop.f32.mrf.mxu0
        %v1833 = vadd.f32 %v1704, %v1832
        %1834 = vmatmul.bf16.gmra.mxu0 %v1198
        %v1835 = vpop.f32.mrf.mxu0
        %v1836 = vadd.f32 %v1705, %v1835
        %v1837 = vpop.f32.mrf.mxu0
        %v1838 = vadd.f32 %v1706, %v1837
        %1839 = vmatmul.bf16.gmra.mxu0 %v1199
        %v1840 = vpop.f32.mrf.mxu0
        %v1841 = vadd.f32 %v1707, %v1840
        %v1842 = vpop.f32.mrf.mxu0
        %v1843 = vadd.f32 %v1708, %v1842
        %1844 = vmatmul.bf16.gmra.mxu0 %v1200
        %v1845 = vpop.f32.mrf.mxu0
        %v1846 = vadd.f32 %v1709, %v1845
        %v1847 = vpop.f32.mrf.mxu0
        %v1848 = vadd.f32 %v1710, %v1847
        %1849 = vmatmul.bf16.gmra.mxu0 %v1201
        %v1850 = vpop.f32.mrf.mxu0
        %v1851 = vadd.f32 %v1711, %v1850
        %v1852 = vpop.f32.mrf.mxu0
        %v1853 = vadd.f32 %v1712, %v1852
        %1854 = vmatmul.bf16.gmra.mxu0 %v1202
        %v1855 = vpop.f32.mrf.mxu0
        %v1856 = vadd.f32 %v1713, %v1855
        %v1857 = vpop.f32.mrf.mxu0
        %v1858 = vadd.f32 %v1714, %v1857
        %1859 = vmatmul.bf16.gmra.mxu0 %v1203
        %v1860 = vpop.f32.mrf.mxu0
        %v1861 = vadd.f32 %v1715, %v1860
        %v1862 = vpop.f32.mrf.mxu0
        %v1863 = vadd.f32 %v1716, %v1862
        %1864 = vmatmul.bf16.gmra.mxu0 %v1204
        %v1865 = vpop.f32.mrf.mxu0
        %v1866 = vadd.f32 %v1717, %v1865
        %v1867 = vpop.f32.mrf.mxu0
        %v1868 = vadd.f32 %v1718, %v1867
        %1869 = vmatmul.bf16.gmra.mxu0 %v1205
        %v1870 = vpop.f32.mrf.mxu0
        %v1871 = vadd.f32 %v1719, %v1870
        %v1872 = vpop.f32.mrf.mxu0
        %v1873 = vadd.f32 %v1720, %v1872
        %1874 = vmatmul.bf16.gmra.mxu0 %v1206
        %v1875 = vpop.f32.mrf.mxu0
        %v1876 = vadd.f32 %v1721, %v1875
        %v1877 = vpop.f32.mrf.mxu0
        %v1878 = vadd.f32 %v1722, %v1877
        %1879 = vmatmul.bf16.gmra.mxu0 %v1207
        %v1880 = vpop.f32.mrf.mxu0
        %v1881 = vadd.f32 %v1723, %v1880
        %v1882 = vpop.f32.mrf.mxu0
        %v1883 = vadd.f32 %v1724, %v1882
        %1884 = vmatmul.bf16.gmra.mxu0 %v1208
        %v1885 = vpop.f32.mrf.mxu0
        %v1886 = vadd.f32 %v1725, %v1885
        %v1887 = vpop.f32.mrf.mxu0
        %v1888 = vadd.f32 %v1726, %v1887
        %1889 = vmatmul.bf16.gmra.mxu0 %v1209
        %v1890 = vpop.f32.mrf.mxu0
        %v1891 = vadd.f32 %v1727, %v1890
        %v1892 = vpop.f32.mrf.mxu0
        %v1893 = vadd.f32 %v1728, %v1892
        %1894 = vmatmul.bf16.gmra.mxu0 %v1210
        %v1895 = vpop.f32.mrf.mxu0
        %v1896 = vadd.f32 %v1729, %v1895
        %v1897 = vpop.f32.mrf.mxu0
        %v1898 = vadd.f32 %v1730, %v1897
        %1899 = vmatmul.bf16.gmra.mxu0 %v1211
        %v1900 = vpop.f32.mrf.mxu0
        %v1901 = vadd.f32 %v1731, %v1900
        %v1902 = vpop.f32.mrf.mxu0
        %v1903 = vadd.f32 %v1732, %v1902
        %1904 = vmatmul.bf16.gmra.mxu0 %v1212
        %v1905 = vpop.f32.mrf.mxu0
        %v1906 = vadd.f32 %v1733, %v1905
        %v1907 = vpop.f32.mrf.mxu0
        %v1908 = vadd.f32 %v1734, %v1907
        %1909 = vmatmul.bf16.gmra.mxu0 %v1213
        %v1910 = vpop.f32.mrf.mxu0
        %v1911 = vadd.f32 %v1735, %v1910
        %v1912 = vpop.f32.mrf.mxu0
        %v1913 = vadd.f32 %v1736, %v1912
        %1914 = vmatmul.bf16.gmra.mxu0 %v1214
        %v1915 = vpop.f32.mrf.mxu0
        %v1916 = vadd.f32 %v1737, %v1915
        %v1917 = vpop.f32.mrf.mxu0
        %v1918 = vadd.f32 %v1738, %v1917
        %1919 = vmatmul.bf16.gmra.mxu0 %v1215
        %v1920 = vpop.f32.mrf.mxu0
        %v1921 = vadd.f32 %v1739, %v1920
        %v1922 = vpop.f32.mrf.mxu0
        %v1923 = vadd.f32 %v1740, %v1922
        %1924 = vmatmul.bf16.gmra.mxu0 %v1216
        %v1925 = vpop.f32.mrf.mxu0
        %v1926 = vadd.f32 %v1741, %v1925
        %v1927 = vpop.f32.mrf.mxu0
        %v1928 = vadd.f32 %v1742, %v1927
        %1929 = vmatmul.bf16.gmra.mxu0 %v1217
        %v1930 = vpop.f32.mrf.mxu0
        %v1931 = vadd.f32 %v1743, %v1930
        %v1932 = vpop.f32.mrf.mxu0
        %v1933 = vadd.f32 %v1744, %v1932
        %1934 = vmatmul.bf16.gmra.mxu0 %v1218
        %v1935 = vpop.f32.mrf.mxu0
        %v1936 = vadd.f32 %v1745, %v1935
        %v1937 = vpop.f32.mrf.mxu0
        %v1938 = vadd.f32 %v1746, %v1937
        %1939 = vmatmul.bf16.gmra.mxu0 %v1219
        %v1940 = vpop.f32.mrf.mxu0
        %v1941 = vadd.f32 %v1747, %v1940
        %v1942 = vpop.f32.mrf.mxu0
        %v1943 = vadd.f32 %v1748, %v1942
        %1944 = vmatmul.bf16.gmra.mxu0 %v1220
        %v1945 = vpop.f32.mrf.mxu0
        %v1946 = vadd.f32 %v1749, %v1945
        %v1947 = vpop.f32.mrf.mxu0
        %v1948 = vadd.f32 %v1750, %v1947
        %1949 = vmatmul.bf16.gmra.mxu0 %v1221
        %v1950 = vpop.f32.mrf.mxu0
        %v1951 = vadd.f32 %v1751, %v1950
        %v1952 = vpop.f32.mrf.mxu0
        %v1953 = vadd.f32 %v1752, %v1952
        %1954 = vmatmul.bf16.gmra.mxu0 %v1222
        %v1955 = vpop.f32.mrf.mxu0
        %v1956 = vadd.f32 %v1753, %v1955
        %v1957 = vpop.f32.mrf.mxu0
        %v1958 = vadd.f32 %v1754, %v1957
        %1959 = vmatmul.bf16.gmra.mxu0 %v1223
        %v1960 = vpop.f32.mrf.mxu0
        %v1961 = vadd.f32 %v1755, %v1960
        %v1962 = vpop.f32.mrf.mxu0
        %v1963 = vadd.f32 %v1756, %v1962
        %1964 = vmatmul.bf16.gmra.mxu0 %v1224
        %v1965 = vpop.f32.mrf.mxu0
        %v1966 = vadd.f32 %v1757, %v1965
        %v1967 = vpop.f32.mrf.mxu0
        %v1968 = vadd.f32 %v1758, %v1967
        %1969 = vmatmul.bf16.gmra.mxu0 %v1225
        %v1970 = vpop.f32.mrf.mxu0
        %v1971 = vadd.f32 %v1759, %v1970
        %v1972 = vpop.f32.mrf.mxu0
        %v1973 = vadd.f32 %v1760, %v1972
        %1974 = vmatmul.bf16.gmra.mxu0 %v1226
        %v1975 = vpop.f32.mrf.mxu0
        %v1976 = vadd.f32 %v1761, %v1975
        %v1977 = vpop.f32.mrf.mxu0
        %v1978 = vadd.f32 %v1762, %v1977
        %1979 = vdwg.mxu0
        %1980 = vst [vmem:[%s277] sm:$0xff] %v1821
        %1981 = vst [vmem:[%s277 + $0x8] sm:$0xff] %v1823
        %1982 = vst [vmem:[%s277 + $0x10] sm:$0xff] %v1826
        %1983 = vst [vmem:[%s277 + $0x18] sm:$0xff] %v1828
        %1984 = vst [vmem:[%s277 + $0x20] sm:$0xff] %v1831
        %1985 = vst [vmem:[%s277 + $0x28] sm:$0xff] %v1833
        %1986 = vst [vmem:[%s277 + $0x30] sm:$0xff] %v1836
        %1987 = vst [vmem:[%s277 + $0x38] sm:$0xff] %v1838
        %1988 = vst [vmem:[%s277 + $0x40] sm:$0xff] %v1841
        %1989 = vst [vmem:[%s277 + $0x48] sm:$0xff] %v1843
        %1990 = vst [vmem:[%s277 + $0x50] sm:$0xff] %v1846
        %1991 = vst [vmem:[%s277 + $0x58] sm:$0xff] %v1848
        %1992 = vst [vmem:[%s277 + $0x60] sm:$0xff] %v1851
        %1993 = vst [vmem:[%s277 + $0x68] sm:$0xff] %v1853
        %1994 = vst [vmem:[%s277 + $0x70] sm:$0xff] %v1856
        %1995 = vst [vmem:[%s277 + $0x78] sm:$0xff] %v1858
        %1996 = vst [vmem:[%s277 + $0x80] sm:$0xff] %v1861
        %1997 = vst [vmem:[%s277 + $0x88] sm:$0xff] %v1863
        %1998 = vst [vmem:[%s277 + $0x90] sm:$0xff] %v1866
        %1999 = vst [vmem:[%s277 + $0x98] sm:$0xff] %v1868
        %2000 = vst [vmem:[%s277 + $0xa0] sm:$0xff] %v1871
        %2001 = vst [vmem:[%s277 + $0xa8] sm:$0xff] %v1873
        %2002 = vst [vmem:[%s277 + $0xb0] sm:$0xff] %v1876
        %2003 = vst [vmem:[%s277 + $0xb8] sm:$0xff] %v1878
        %2004 = vst [vmem:[%s277 + $0xc0] sm:$0xff] %v1881
        %2005 = vst [vmem:[%s277 + $0xc8] sm:$0xff] %v1883
        %2006 = vst [vmem:[%s277 + $0xd0] sm:$0xff] %v1886
        %2007 = vst [vmem:[%s277 + $0xd8] sm:$0xff] %v1888
        %2008 = vst [vmem:[%s277 + $0xe0] sm:$0xff] %v1891
        %2009 = vst [vmem:[%s277 + $0xe8] sm:$0xff] %v1893
        %2010 = vst [vmem:[%s277 + $0xf0] sm:$0xff] %v1896
        %2011 = vst [vmem:[%s277 + $0xf8] sm:$0xff] %v1898
        %2012 = vst [vmem:[%s277 + $0x100] sm:$0xff] %v1901
        %2013 = vst [vmem:[%s277 + $0x108] sm:$0xff] %v1903
        %2014 = vst [vmem:[%s277 + $0x110] sm:$0xff] %v1906
        %2015 = vst [vmem:[%s277 + $0x118] sm:$0xff] %v1908
        %2016 = vst [vmem:[%s277 + $0x120] sm:$0xff] %v1911
        %2017 = vst [vmem:[%s277 + $0x128] sm:$0xff] %v1913
        %2018 = vst [vmem:[%s277 + $0x130] sm:$0xff] %v1916
        %2019 = vst [vmem:[%s277 + $0x138] sm:$0xff] %v1918
        %2020 = vst [vmem:[%s277 + $0x140] sm:$0xff] %v1921
        %2021 = vst [vmem:[%s277 + $0x148] sm:$0xff] %v1923
        %2022 = vst [vmem:[%s277 + $0x150] sm:$0xff] %v1926
        %2023 = vst [vmem:[%s277 + $0x158] sm:$0xff] %v1928
        %2024 = vst [vmem:[%s277 + $0x160] sm:$0xff] %v1931
        %2025 = vst [vmem:[%s277 + $0x168] sm:$0xff] %v1933
        %2026 = vst [vmem:[%s277 + $0x170] sm:$0xff] %v1936
        %2027 = vst [vmem:[%s277 + $0x178] sm:$0xff] %v1938
        %2028 = vst [vmem:[%s277 + $0x180] sm:$0xff] %v1941
        %2029 = vst [vmem:[%s277 + $0x188] sm:$0xff] %v1943
        %2030 = vst [vmem:[%s277 + $0x190] sm:$0xff] %v1946
        %2031 = vst [vmem:[%s277 + $0x198] sm:$0xff] %v1948
        %2032 = vst [vmem:[%s277 + $0x1a0] sm:$0xff] %v1951
        %2033 = vst [vmem:[%s277 + $0x1a8] sm:$0xff] %v1953
        %2034 = vst [vmem:[%s277 + $0x1b0] sm:$0xff] %v1956
        %2035 = vst [vmem:[%s277 + $0x1b8] sm:$0xff] %v1958
        %2036 = vst [vmem:[%s277 + $0x1c0] sm:$0xff] %v1961
        %2037 = vst [vmem:[%s277 + $0x1c8] sm:$0xff] %v1963
        %2038 = vst [vmem:[%s277 + $0x1d0] sm:$0xff] %v1966
        %2039 = vst [vmem:[%s277 + $0x1d8] sm:$0xff] %v1968
        %2040 = vst [vmem:[%s277 + $0x1e0] sm:$0xff] %v1971
        %2041 = vst [vmem:[%s277 + $0x1e8] sm:$0xff] %v1973
        %2042 = vst [vmem:[%s277 + $0x1f0] sm:$0xff] %v1976
        %2043 = vst [vmem:[%s277 + $0x1f8] sm:$0xff] %v1978
        %s2044 = sand.u32 %s169, 1
        %s2045 = scalar_lea.sflag [#allocation3], %s2044
        %s2046 = sand.u32 %s169, 1
        %s2047 = smul.addr %s2046, 512
        %s2048 = scalar_lea.vmem [#allocation2], %s2047
        // Predicated region
        $region45: #{tpu_custom_call.1} parent=43 // pred_check
          %p2049 = pneg %p179
        $region46: #{tpu_custom_call.1} parent=43 // pred_check_branch
          %2051 = sbr.rel (%p2049) target = $region48
        $region47: #{tpu_custom_call.1} parent=43 // pred_region
          %s2052 = smul.u32 64, %s20
          %2054 = vsyncadd %s2045, 0
          %s2055 = smul.addr %s2052, 8
          %s2056 = scalar_lea.hbm %s6, %s2055
          %s2057 = sshll.u32 %s2048, 4
          %s2058 = int_to_ptr.vmem [resolvable:$true] %s2057
          %s2059 = sshll.u32 %s2056, 4
          %s2060 = int_to_ptr.hbm [resolvable:$true] %s2059
          %2065 = dma.vmem_to_hbm [thread:$0]  %s2058, 8192, %s2060, %s2045, 128, 128, 8
        $region48: #{tpu_custom_call.1} parent=43 // pred_fallthru
          _
      $region44: #{tpu_custom_call.1} parent=5 // pred_fallthru
        _
      %p2066 = scmp.le.s32.totalorder 2, %s15
      // Predicated region
      $region49: #{tpu_custom_call.1} parent=5 // pred_check
        %p2067 = pneg %p2066
      $region50: #{tpu_custom_call.1} parent=5 // pred_check_branch
        %2069 = sbr.rel (%p2067) target = $region52
      $region51: #{tpu_custom_call.1} parent=5 // pred_region
        %s2070 = ssub.s32 %s15, 2
        // Predicated region
        $region53: #{tpu_custom_call.1} parent=51 // pred_check
          %p2071 = pneg %p185
        $region54: #{tpu_custom_call.1} parent=51 // pred_check_branch
          %2073 = sbr.rel (%p2071) target = $region56
        $region55: #{tpu_custom_call.1} parent=51 // pred_region
          %s2074 = sand.u32 %s170, 1
          %s2075 = scalar_lea.sflag [#allocation3], %s2074
          %s2076 = sand.u32 %s170, 1
          %s2077 = smul.addr %s2076, 512
          %s2078 = scalar_lea.vmem [#allocation2], %s2077
          %2080 = dma.done %s2075, 8192
        $region56: #{tpu_custom_call.1} parent=51 // pred_fallthru
          _
      $region52: #{tpu_custom_call.1} parent=5 // pred_fallthru
        _
    $region6: #{tpu_custom_call.1} parent=1 // loop_footer
      %s19 = sadd.s32 1, %s15
    $region7: #{tpu_custom_call.1} parent=1 // loop_footer_branch
      %14 = sbr.rel target = $region3
    $region8: #{tpu_custom_call.1} parent=1 // loop_exit
      _
    %2081 = vsyncpa [#allocation3], 1
    %s2082 = scalar_lea.sflag [#allocation3], 1
    %2083 = vsyncpa %s2082, 1

</llo_original>
